<compile_context>
chip_gen: v7x
topology: tpu7x:2x2x1
jax: 0.10.0
libtpu: 0.0.40
codegen_flags: <defaults>
</compile_context>

<pallas_src>
import jax
import jax.numpy as jnp
from jax.experimental import pallas as pl
from jax.experimental.pallas import tpu as pltpu

C_IN = 8    # conv           = ConvTranspose2d(8, 3, 1, stride=1, padding=1)
C_MID = 3
C_OUT = 8   # conv_transpose = ConvTranspose2d(3, 8, 1, stride=1, padding=1)


def fused_kernel(x_ref, w_ref, b_ref, o_ref):
    # x_ref: (C_IN, H, W)   one batch element (batch dim squeezed by BlockSpec)
    # w_ref: (C_OUT, C_IN)  fused 1x1 weight   (Wf = W2 @ W1)
    # b_ref: (C_OUT, 1)     fused bias         (bf = W2 @ b1 + b2)
    # o_ref: (C_OUT, Hc, Wc) cropped output, Hc = H - 4, Wc = W - 4
    W = x_ref.shape[2]
    Hc = o_ref.shape[1]
    w = w_ref[...]
    b = b_ref[...]
    # Static row loop (Hc is small at these shapes).  Each output row is one
    # fused (8,8)@(8,W) channel matmul on the MXU plus the VPU hard-sigmoid
    # epilogue; the 2-pixel border crop happens on the store, never in HBM.
    for r in range(Hc):
        xr = x_ref[:, r + 2, :]                                   # (C_IN, W)
        y = jnp.dot(w, xr, preferred_element_type=jnp.float32) + b
        # v3 = v2 + 3 ; v4 = clamp_min(v3, 0) ; v5 = clamp_max(v4, 6) ; v6 = v5 / 6
        y = jnp.clip(y + 3.0, 0.0, 6.0) * (1.0 / 6.0)
        o_ref[:, r, :] = y[:, 2:W - 2].astype(o_ref.dtype)


def model_forward(x, w_conv, b_conv, w_convt, b_convt):
    """x: (N, 8, H, W) float32, NCHW.

    Reproduced semantics:
      v0  = ConvTranspose2d(8->3, k=1, s=1, p=1)(x)   # 1x1 matmul + crop 1px/side
      v2  = ConvTranspose2d(3->8, k=1, s=1, p=1)(v0)  # 1x1 matmul + crop 1px/side
      out = clamp(v2 + 3, 0, 6) / 6
    """
    # TODO(synk): the original forward calls `self.conv` a second time on its own
    # 3-channel output, which is channel-shape-invalid even in PyTorch (the source
    # file comes from a jit_fail corpus); that invalid second call is omitted here.
    N, C, H, W = x.shape
    assert C == C_IN and H > 4 and W > 4
    Hc, Wc = H - 4, W - 4

    # ConvTranspose2d weight layout is (in_ch, out_ch, kH, kW).
    w1 = w_conv[:, :, 0, 0]        # (C_IN, C_MID):  w1[i, m]
    w2 = w_convt[:, :, 0, 0]       # (C_MID, C_OUT): w2[m, o]
    a = w2.T                       # (C_OUT, C_MID): a[o, m]
    b1t = w1.T                     # (C_MID, C_IN):  b1t[m, i]
    # Fused pointwise conv (exact f32, elementwise + sum; no low-precision dot):
    #   wf[o, i] = sum_m w2[m, o] * w1[i, m]
    #   bf[o]    = sum_m w2[m, o] * b_conv[m] + b_convt[o]
    wf = jnp.sum(a[:, :, None] * b1t[None, :, :], axis=1)          # (C_OUT, C_IN)
    bf = (jnp.sum(a * b_conv[None, :], axis=1) + b_convt).reshape(C_OUT, 1)

    out = pl.pallas_call(
        fused_kernel,
        out_shape=jax.ShapeDtypeStruct((N, C_OUT, Hc, Wc), jnp.float32),
        grid_spec=pltpu.PrefetchScalarGridSpec(
            num_scalar_prefetch=0,
            grid=(N,),
            in_specs=[
                pl.BlockSpec((None, C_IN, H, W), lambda n: (n, 0, 0, 0)),
                pl.BlockSpec((C_OUT, C_IN), lambda n: (0, 0)),
                pl.BlockSpec((C_OUT, 1), lambda n: (0, 0)),
            ],
            out_specs=pl.BlockSpec((None, C_OUT, Hc, Wc), lambda n: (n, 0, 0, 0)),
        ),
        compiler_params=pltpu.CompilerParams(
            dimension_semantics=("parallel",)),
    )(x, wf, bf)
    return out


def ref_forward(x, w_conv, b_conv, w_convt, b_convt):
    """Pure-JAX reference for the same semantics."""
    xc = x[:, :, 1:-1, 1:-1]
    v0 = jnp.einsum("io,nihw->nohw", w_conv[:, :, 0, 0], xc) \
        + b_conv[None, :, None, None]
    v0c = v0[:, :, 1:-1, 1:-1]
    v2 = jnp.einsum("io,nihw->nohw", w_convt[:, :, 0, 0], v0c) \
        + b_convt[None, :, None, None]
    return jnp.clip(v2 + 3.0, 0.0, 6.0) / 6.0


if __name__ == "__main__":
    key = jax.random.PRNGKey(0)
    k1, k2, k3, k4, kx = jax.random.split(key, 5)

    N, H, W = 2, 16, 16
    x = jax.random.normal(kx, (N, C_IN, H, W), dtype=jnp.float32)

    # Deterministic PyTorch-style uniform init (bound = 1/sqrt(fan)).
    bound1 = 1.0 / (C_IN ** 0.5)
    w_conv = jax.random.uniform(k1, (C_IN, C_MID, 1, 1), jnp.float32, -bound1, bound1)
    b_conv = jax.random.uniform(k2, (C_MID,), jnp.float32, -bound1, bound1)
    bound2 = 1.0 / (C_MID ** 0.5)
    w_convt = jax.random.uniform(k3, (C_MID, C_OUT, 1, 1), jnp.float32, -bound2, bound2)
    b_convt = jax.random.uniform(k4, (C_OUT,), jnp.float32, -bound2, bound2)

    out = model_forward(x, w_conv, b_conv, w_convt, b_convt)
    jax.block_until_ready(out)

    ref = ref_forward(x, w_conv, b_conv, w_convt, b_convt)
    assert out.shape == (N, C_OUT, H - 4, W - 4), out.shape
    assert jnp.allclose(out, ref, atol=1e-5, rtol=1e-5), "mismatch vs reference"
    print("KERNEL_OK")
</pallas_src>

<mosaic_0001>
module attributes {stable_mosaic.version = 11 : i64} {
  func.func @fused_kernel(%arg0: i32, %arg1: memref<1x8x16x16xf32, #tpu.memory_space<vmem>>, %arg2: memref<8x8xf32, #tpu.memory_space<vmem>>, %arg3: memref<8x1xf32, #tpu.memory_space<vmem>>, %arg4: memref<1x8x12x12xf32, #tpu.memory_space<vmem>>) attributes {dimension_semantics = [#tpu.dimension_semantics<parallel>], iteration_bounds = array<i64: 2>, scalar_prefetch = 0 : i64, scratch_operands = 0 : i64, tpu.core_type = #tpu.core_type<tc>, window_params = [{transform_indices = @transform_0, window_bounds = array<i64: 1, 8, 16, 16>}, {pipeline_mode = #tpu.pipeline_mode<synchronous>, transform_indices = @transform_1, window_bounds = array<i64: 8, 8>}, {pipeline_mode = #tpu.pipeline_mode<synchronous>, transform_indices = @transform_2, window_bounds = array<i64: 8, 1>}, {transform_indices = @transform_3, window_bounds = array<i64: 1, 8, 12, 12>}]} {
    %c0 = arith.constant 0 : index
    %c0_0 = arith.constant 0 : index
    %0 = vector.load %arg2[%c0, %c0_0] : memref<8x8xf32, #tpu.memory_space<vmem>>, vector<8x8xf32>
    %c0_1 = arith.constant 0 : index
    %c0_2 = arith.constant 0 : index
    %1 = vector.load %arg3[%c0_1, %c0_2] : memref<8x1xf32, #tpu.memory_space<vmem>>, vector<8x1xf32>
    %c0_3 = arith.constant 0 : index
    %c0_4 = arith.constant 0 : index
    %c2 = arith.constant 2 : index
    %c0_5 = arith.constant 0 : index
    %2 = vector.load %arg1[%c0_3, %c0_4, %c2, %c0_5] : memref<1x8x16x16xf32, #tpu.memory_space<vmem>>, vector<1x8x1x16xf32>
    %3 = vector.shape_cast %2 : vector<1x8x1x16xf32> to vector<8x16xf32>
    %cst = arith.constant dense<0.000000e+00> : vector<8x16xf32>
    %4 = tpu.matmul %0, %3, %cst {dimension_numbers = #tpu.dot_dimension_numbers<[1], [0], [0], [1], [0, 0, 1, 1], [], []>} : vector<8x8xf32>, vector<8x16xf32>, vector<8x16xf32> -> vector<8x16xf32>
    %5 = vector.broadcast %1 : vector<8x1xf32> to vector<8x16xf32>
    %6 = arith.addf %4, %5 : vector<8x16xf32>
    %cst_6 = arith.constant 3.000000e+00 : f32
    %7 = vector.broadcast %cst_6 : f32 to vector<8x16xf32>
    %8 = arith.addf %6, %7 : vector<8x16xf32>
    %cst_7 = arith.constant 0.000000e+00 : f32
    %cst_8 = arith.constant 6.000000e+00 : f32
    %9 = vector.broadcast %cst_7 : f32 to vector<8x16xf32>
    %10 = arith.maximumf %9, %8 : vector<8x16xf32>
    %11 = vector.broadcast %cst_8 : f32 to vector<8x16xf32>
    %12 = arith.minimumf %11, %10 : vector<8x16xf32>
    %cst_9 = arith.constant 0.166666672 : f32
    %13 = vector.broadcast %cst_9 : f32 to vector<8x16xf32>
    %14 = arith.mulf %12, %13 : vector<8x16xf32>
    %15 = vector.extract_strided_slice %14 {offsets = [0, 2], sizes = [8, 12], strides = [1, 1]} : vector<8x16xf32> to vector<8x12xf32>
    %c0_10 = arith.constant 0 : index
    %c0_11 = arith.constant 0 : index
    %c0_12 = arith.constant 0 : index
    %c0_13 = arith.constant 0 : index
    %16 = vector.load %arg4[%c0_10, %c0_11, %c0_12, %c0_13] : memref<1x8x12x12xf32, #tpu.memory_space<vmem>>, vector<1x8x1x12xf32>
    %17 = vector.shape_cast %16 : vector<1x8x1x12xf32> to vector<8x12xf32>
    %18 = vector.shape_cast %15 : vector<8x12xf32> to vector<1x8x1x12xf32>
    tpu.vector_store %arg4[%c0_10, %c0_11, %c0_12, %c0_13], %18 {strides = array<i32>} : memref<1x8x12x12xf32, #tpu.memory_space<vmem>>, vector<1x8x1x12xf32>,
    %c0_14 = arith.constant 0 : index
    %c0_15 = arith.constant 0 : index
    %c3 = arith.constant 3 : index
    %c0_16 = arith.constant 0 : index
    %19 = vector.load %arg1[%c0_14, %c0_15, %c3, %c0_16] : memref<1x8x16x16xf32, #tpu.memory_space<vmem>>, vector<1x8x1x16xf32>
    %20 = vector.shape_cast %19 : vector<1x8x1x16xf32> to vector<8x16xf32>
    %cst_17 = arith.constant dense<0.000000e+00> : vector<8x16xf32>
    %21 = tpu.matmul %0, %20, %cst_17 {dimension_numbers = #tpu.dot_dimension_numbers<[1], [0], [0], [1], [0, 0, 1, 1], [], []>} : vector<8x8xf32>, vector<8x16xf32>, vector<8x16xf32> -> vector<8x16xf32>
    %22 = vector.broadcast %1 : vector<8x1xf32> to vector<8x16xf32>
    %23 = arith.addf %21, %22 : vector<8x16xf32>
    %cst_18 = arith.constant 3.000000e+00 : f32
    %24 = vector.broadcast %cst_18 : f32 to vector<8x16xf32>
    %25 = arith.addf %23, %24 : vector<8x16xf32>
    %cst_19 = arith.constant 0.000000e+00 : f32
    %cst_20 = arith.constant 6.000000e+00 : f32
    %26 = vector.broadcast %cst_19 : f32 to vector<8x16xf32>
    %27 = arith.maximumf %26, %25 : vector<8x16xf32>
    %28 = vector.broadcast %cst_20 : f32 to vector<8x16xf32>
    %29 = arith.minimumf %28, %27 : vector<8x16xf32>
    %cst_21 = arith.constant 0.166666672 : f32
    %30 = vector.broadcast %cst_21 : f32 to vector<8x16xf32>
    %31 = arith.mulf %29, %30 : vector<8x16xf32>
    %32 = vector.extract_strided_slice %31 {offsets = [0, 2], sizes = [8, 12], strides = [1, 1]} : vector<8x16xf32> to vector<8x12xf32>
    %c0_22 = arith.constant 0 : index
    %c0_23 = arith.constant 0 : index
    %c1 = arith.constant 1 : index
    %c0_24 = arith.constant 0 : index
    %33 = vector.load %arg4[%c0_22, %c0_23, %c1, %c0_24] : memref<1x8x12x12xf32, #tpu.memory_space<vmem>>, vector<1x8x1x12xf32>
    %34 = vector.shape_cast %33 : vector<1x8x1x12xf32> to vector<8x12xf32>
    %35 = vector.shape_cast %32 : vector<8x12xf32> to vector<1x8x1x12xf32>
    tpu.vector_store %arg4[%c0_22, %c0_23, %c1, %c0_24], %35 {strides = array<i32>} : memref<1x8x12x12xf32, #tpu.memory_space<vmem>>, vector<1x8x1x12xf32>,
    %c0_25 = arith.constant 0 : index
    %c0_26 = arith.constant 0 : index
    %c4 = arith.constant 4 : index
    %c0_27 = arith.constant 0 : index
    %36 = vector.load %arg1[%c0_25, %c0_26, %c4, %c0_27] : memref<1x8x16x16xf32, #tpu.memory_space<vmem>>, vector<1x8x1x16xf32>
    %37 = vector.shape_cast %36 : vector<1x8x1x16xf32> to vector<8x16xf32>
    %cst_28 = arith.constant dense<0.000000e+00> : vector<8x16xf32>
    %38 = tpu.matmul %0, %37, %cst_28 {dimension_numbers = #tpu.dot_dimension_numbers<[1], [0], [0], [1], [0, 0, 1, 1], [], []>} : vector<8x8xf32>, vector<8x16xf32>, vector<8x16xf32> -> vector<8x16xf32>
    %39 = vector.broadcast %1 : vector<8x1xf32> to vector<8x16xf32>
    %40 = arith.addf %38, %39 : vector<8x16xf32>
    %cst_29 = arith.constant 3.000000e+00 : f32
    %41 = vector.broadcast %cst_29 : f32 to vector<8x16xf32>
    %42 = arith.addf %40, %41 : vector<8x16xf32>
    %cst_30 = arith.constant 0.000000e+00 : f32
    %cst_31 = arith.constant 6.000000e+00 : f32
    %43 = vector.broadcast %cst_30 : f32 to vector<8x16xf32>
    %44 = arith.maximumf %43, %42 : vector<8x16xf32>
    %45 = vector.broadcast %cst_31 : f32 to vector<8x16xf32>
    %46 = arith.minimumf %45, %44 : vector<8x16xf32>
    %cst_32 = arith.constant 0.166666672 : f32
    %47 = vector.broadcast %cst_32 : f32 to vector<8x16xf32>
    %48 = arith.mulf %46, %47 : vector<8x16xf32>
    %49 = vector.extract_strided_slice %48 {offsets = [0, 2], sizes = [8, 12], strides = [1, 1]} : vector<8x16xf32> to vector<8x12xf32>
    %c0_33 = arith.constant 0 : index
    %c0_34 = arith.constant 0 : index
    %c2_35 = arith.constant 2 : index
    %c0_36 = arith.constant 0 : index
    %50 = vector.load %arg4[%c0_33, %c0_34, %c2_35, %c0_36] : memref<1x8x12x12xf32, #tpu.memory_space<vmem>>, vector<1x8x1x12xf32>
    %51 = vector.shape_cast %50 : vector<1x8x1x12xf32> to vector<8x12xf32>
    %52 = vector.shape_cast %49 : vector<8x12xf32> to vector<1x8x1x12xf32>
    tpu.vector_store %arg4[%c0_33, %c0_34, %c2_35, %c0_36], %52 {strides = array<i32>} : memref<1x8x12x12xf32, #tpu.memory_space<vmem>>, vector<1x8x1x12xf32>,
    %c0_37 = arith.constant 0 : index
    %c0_38 = arith.constant 0 : index
    %c5 = arith.constant 5 : index
    %c0_39 = arith.constant 0 : index
    %53 = vector.load %arg1[%c0_37, %c0_38, %c5, %c0_39] : memref<1x8x16x16xf32, #tpu.memory_space<vmem>>, vector<1x8x1x16xf32>
    %54 = vector.shape_cast %53 : vector<1x8x1x16xf32> to vector<8x16xf32>
    %cst_40 = arith.constant dense<0.000000e+00> : vector<8x16xf32>
    %55 = tpu.matmul %0, %54, %cst_40 {dimension_numbers = #tpu.dot_dimension_numbers<[1], [0], [0], [1], [0, 0, 1, 1], [], []>} : vector<8x8xf32>, vector<8x16xf32>, vector<8x16xf32> -> vector<8x16xf32>
    %56 = vector.broadcast %1 : vector<8x1xf32> to vector<8x16xf32>
    %57 = arith.addf %55, %56 : vector<8x16xf32>
    %cst_41 = arith.constant 3.000000e+00 : f32
    %58 = vector.broadcast %cst_41 : f32 to vector<8x16xf32>
    %59 = arith.addf %57, %58 : vector<8x16xf32>
    %cst_42 = arith.constant 0.000000e+00 : f32
    %cst_43 = arith.constant 6.000000e+00 : f32
    %60 = vector.broadcast %cst_42 : f32 to vector<8x16xf32>
    %61 = arith.maximumf %60, %59 : vector<8x16xf32>
    %62 = vector.broadcast %cst_43 : f32 to vector<8x16xf32>
    %63 = arith.minimumf %62, %61 : vector<8x16xf32>
    %cst_44 = arith.constant 0.166666672 : f32
    %64 = vector.broadcast %cst_44 : f32 to vector<8x16xf32>
    %65 = arith.mulf %63, %64 : vector<8x16xf32>
    %66 = vector.extract_strided_slice %65 {offsets = [0, 2], sizes = [8, 12], strides = [1, 1]} : vector<8x16xf32> to vector<8x12xf32>
    %c0_45 = arith.constant 0 : index
    %c0_46 = arith.constant 0 : index
    %c3_47 = arith.constant 3 : index
    %c0_48 = arith.constant 0 : index
    %67 = vector.load %arg4[%c0_45, %c0_46, %c3_47, %c0_48] : memref<1x8x12x12xf32, #tpu.memory_space<vmem>>, vector<1x8x1x12xf32>
    %68 = vector.shape_cast %67 : vector<1x8x1x12xf32> to vector<8x12xf32>
    %69 = vector.shape_cast %66 : vector<8x12xf32> to vector<1x8x1x12xf32>
    tpu.vector_store %arg4[%c0_45, %c0_46, %c3_47, %c0_48], %69 {strides = array<i32>} : memref<1x8x12x12xf32, #tpu.memory_space<vmem>>, vector<1x8x1x12xf32>,
    %c0_49 = arith.constant 0 : index
    %c0_50 = arith.constant 0 : index
    %c6 = arith.constant 6 : index
    %c0_51 = arith.constant 0 : index
    %70 = vector.load %arg1[%c0_49, %c0_50, %c6, %c0_51] : memref<1x8x16x16xf32, #tpu.memory_space<vmem>>, vector<1x8x1x16xf32>
    %71 = vector.shape_cast %70 : vector<1x8x1x16xf32> to vector<8x16xf32>
    %cst_52 = arith.constant dense<0.000000e+00> : vector<8x16xf32>
    %72 = tpu.matmul %0, %71, %cst_52 {dimension_numbers = #tpu.dot_dimension_numbers<[1], [0], [0], [1], [0, 0, 1, 1], [], []>} : vector<8x8xf32>, vector<8x16xf32>, vector<8x16xf32> -> vector<8x16xf32>
    %73 = vector.broadcast %1 : vector<8x1xf32> to vector<8x16xf32>
    %74 = arith.addf %72, %73 : vector<8x16xf32>
    %cst_53 = arith.constant 3.000000e+00 : f32
    %75 = vector.broadcast %cst_53 : f32 to vector<8x16xf32>
    %76 = arith.addf %74, %75 : vector<8x16xf32>
    %cst_54 = arith.constant 0.000000e+00 : f32
    %cst_55 = arith.constant 6.000000e+00 : f32
    %77 = vector.broadcast %cst_54 : f32 to vector<8x16xf32>
    %78 = arith.maximumf %77, %76 : vector<8x16xf32>
    %79 = vector.broadcast %cst_55 : f32 to vector<8x16xf32>
    %80 = arith.minimumf %79, %78 : vector<8x16xf32>
    %cst_56 = arith.constant 0.166666672 : f32
    %81 = vector.broadcast %cst_56 : f32 to vector<8x16xf32>
    %82 = arith.mulf %80, %81 : vector<8x16xf32>
    %83 = vector.extract_strided_slice %82 {offsets = [0, 2], sizes = [8, 12], strides = [1, 1]} : vector<8x16xf32> to vector<8x12xf32>
    %c0_57 = arith.constant 0 : index
    %c0_58 = arith.constant 0 : index
    %c4_59 = arith.constant 4 : index
    %c0_60 = arith.constant 0 : index
    %84 = vector.load %arg4[%c0_57, %c0_58, %c4_59, %c0_60] : memref<1x8x12x12xf32, #tpu.memory_space<vmem>>, vector<1x8x1x12xf32>
    %85 = vector.shape_cast %84 : vector<1x8x1x12xf32> to vector<8x12xf32>
    %86 = vector.shape_cast %83 : vector<8x12xf32> to vector<1x8x1x12xf32>
    tpu.vector_store %arg4[%c0_57, %c0_58, %c4_59, %c0_60], %86 {strides = array<i32>} : memref<1x8x12x12xf32, #tpu.memory_space<vmem>>, vector<1x8x1x12xf32>,
    %c0_61 = arith.constant 0 : index
    %c0_62 = arith.constant 0 : index
    %c7 = arith.constant 7 : index
    %c0_63 = arith.constant 0 : index
    %87 = vector.load %arg1[%c0_61, %c0_62, %c7, %c0_63] : memref<1x8x16x16xf32, #tpu.memory_space<vmem>>, vector<1x8x1x16xf32>
    %88 = vector.shape_cast %87 : vector<1x8x1x16xf32> to vector<8x16xf32>
    %cst_64 = arith.constant dense<0.000000e+00> : vector<8x16xf32>
    %89 = tpu.matmul %0, %88, %cst_64 {dimension_numbers = #tpu.dot_dimension_numbers<[1], [0], [0], [1], [0, 0, 1, 1], [], []>} : vector<8x8xf32>, vector<8x16xf32>, vector<8x16xf32> -> vector<8x16xf32>
    %90 = vector.broadcast %1 : vector<8x1xf32> to vector<8x16xf32>
    %91 = arith.addf %89, %90 : vector<8x16xf32>
    %cst_65 = arith.constant 3.000000e+00 : f32
    %92 = vector.broadcast %cst_65 : f32 to vector<8x16xf32>
    %93 = arith.addf %91, %92 : vector<8x16xf32>
    %cst_66 = arith.constant 0.000000e+00 : f32
    %cst_67 = arith.constant 6.000000e+00 : f32
    %94 = vector.broadcast %cst_66 : f32 to vector<8x16xf32>
    %95 = arith.maximumf %94, %93 : vector<8x16xf32>
    %96 = vector.broadcast %cst_67 : f32 to vector<8x16xf32>
    %97 = arith.minimumf %96, %95 : vector<8x16xf32>
    %cst_68 = arith.constant 0.166666672 : f32
    %98 = vector.broadcast %cst_68 : f32 to vector<8x16xf32>
    %99 = arith.mulf %97, %98 : vector<8x16xf32>
    %100 = vector.extract_strided_slice %99 {offsets = [0, 2], sizes = [8, 12], strides = [1, 1]} : vector<8x16xf32> to vector<8x12xf32>
    %c0_69 = arith.constant 0 : index
    %c0_70 = arith.constant 0 : index
    %c5_71 = arith.constant 5 : index
    %c0_72 = arith.constant 0 : index
    %101 = vector.load %arg4[%c0_69, %c0_70, %c5_71, %c0_72] : memref<1x8x12x12xf32, #tpu.memory_space<vmem>>, vector<1x8x1x12xf32>
    %102 = vector.shape_cast %101 : vector<1x8x1x12xf32> to vector<8x12xf32>
    %103 = vector.shape_cast %100 : vector<8x12xf32> to vector<1x8x1x12xf32>
    tpu.vector_store %arg4[%c0_69, %c0_70, %c5_71, %c0_72], %103 {strides = array<i32>} : memref<1x8x12x12xf32, #tpu.memory_space<vmem>>, vector<1x8x1x12xf32>,
    %c0_73 = arith.constant 0 : index
    %c0_74 = arith.constant 0 : index
    %c8 = arith.constant 8 : index
    %c0_75 = arith.constant 0 : index
    %104 = vector.load %arg1[%c0_73, %c0_74, %c8, %c0_75] : memref<1x8x16x16xf32, #tpu.memory_space<vmem>>, vector<1x8x1x16xf32>
    %105 = vector.shape_cast %104 : vector<1x8x1x16xf32> to vector<8x16xf32>
    %cst_76 = arith.constant dense<0.000000e+00> : vector<8x16xf32>
    %106 = tpu.matmul %0, %105, %cst_76 {dimension_numbers = #tpu.dot_dimension_numbers<[1], [0], [0], [1], [0, 0, 1, 1], [], []>} : vector<8x8xf32>, vector<8x16xf32>, vector<8x16xf32> -> vector<8x16xf32>
    %107 = vector.broadcast %1 : vector<8x1xf32> to vector<8x16xf32>
    %108 = arith.addf %106, %107 : vector<8x16xf32>
    %cst_77 = arith.constant 3.000000e+00 : f32
    %109 = vector.broadcast %cst_77 : f32 to vector<8x16xf32>
    %110 = arith.addf %108, %109 : vector<8x16xf32>
    %cst_78 = arith.constant 0.000000e+00 : f32
    %cst_79 = arith.constant 6.000000e+00 : f32
    %111 = vector.broadcast %cst_78 : f32 to vector<8x16xf32>
    %112 = arith.maximumf %111, %110 : vector<8x16xf32>
    %113 = vector.broadcast %cst_79 : f32 to vector<8x16xf32>
    %114 = arith.minimumf %113, %112 : vector<8x16xf32>
    %cst_80 = arith.constant 0.166666672 : f32
    %115 = vector.broadcast %cst_80 : f32 to vector<8x16xf32>
    %116 = arith.mulf %114, %115 : vector<8x16xf32>
    %117 = vector.extract_strided_slice %116 {offsets = [0, 2], sizes = [8, 12], strides = [1, 1]} : vector<8x16xf32> to vector<8x12xf32>
    %c0_81 = arith.constant 0 : index
    %c0_82 = arith.constant 0 : index
    %c6_83 = arith.constant 6 : index
    %c0_84 = arith.constant 0 : index
    %118 = vector.load %arg4[%c0_81, %c0_82, %c6_83, %c0_84] : memref<1x8x12x12xf32, #tpu.memory_space<vmem>>, vector<1x8x1x12xf32>
    %119 = vector.shape_cast %118 : vector<1x8x1x12xf32> to vector<8x12xf32>
    %120 = vector.shape_cast %117 : vector<8x12xf32> to vector<1x8x1x12xf32>
    tpu.vector_store %arg4[%c0_81, %c0_82, %c6_83, %c0_84], %120 {strides = array<i32>} : memref<1x8x12x12xf32, #tpu.memory_space<vmem>>, vector<1x8x1x12xf32>,
    %c0_85 = arith.constant 0 : index
    %c0_86 = arith.constant 0 : index
    %c9 = arith.constant 9 : index
    %c0_87 = arith.constant 0 : index
    %121 = vector.load %arg1[%c0_85, %c0_86, %c9, %c0_87] : memref<1x8x16x16xf32, #tpu.memory_space<vmem>>, vector<1x8x1x16xf32>
    %122 = vector.shape_cast %121 : vector<1x8x1x16xf32> to vector<8x16xf32>
    %cst_88 = arith.constant dense<0.000000e+00> : vector<8x16xf32>
    %123 = tpu.matmul %0, %122, %cst_88 {dimension_numbers = #tpu.dot_dimension_numbers<[1], [0], [0], [1], [0, 0, 1, 1], [], []>} : vector<8x8xf32>, vector<8x16xf32>, vector<8x16xf32> -> vector<8x16xf32>
    %124 = vector.broadcast %1 : vector<8x1xf32> to vector<8x16xf32>
    %125 = arith.addf %123, %124 : vector<8x16xf32>
    %cst_89 = arith.constant 3.000000e+00 : f32
    %126 = vector.broadcast %cst_89 : f32 to vector<8x16xf32>
    %127 = arith.addf %125, %126 : vector<8x16xf32>
    %cst_90 = arith.constant 0.000000e+00 : f32
    %cst_91 = arith.constant 6.000000e+00 : f32
    %128 = vector.broadcast %cst_90 : f32 to vector<8x16xf32>
    %129 = arith.maximumf %128, %127 : vector<8x16xf32>
    %130 = vector.broadcast %cst_91 : f32 to vector<8x16xf32>
    %131 = arith.minimumf %130, %129 : vector<8x16xf32>
    %cst_92 = arith.constant 0.166666672 : f32
    %132 = vector.broadcast %cst_92 : f32 to vector<8x16xf32>
    %133 = arith.mulf %131, %132 : vector<8x16xf32>
    %134 = vector.extract_strided_slice %133 {offsets = [0, 2], sizes = [8, 12], strides = [1, 1]} : vector<8x16xf32> to vector<8x12xf32>
    %c0_93 = arith.constant 0 : index
    %c0_94 = arith.constant 0 : index
    %c7_95 = arith.constant 7 : index
    %c0_96 = arith.constant 0 : index
    %135 = vector.load %arg4[%c0_93, %c0_94, %c7_95, %c0_96] : memref<1x8x12x12xf32, #tpu.memory_space<vmem>>, vector<1x8x1x12xf32>
    %136 = vector.shape_cast %135 : vector<1x8x1x12xf32> to vector<8x12xf32>
    %137 = vector.shape_cast %134 : vector<8x12xf32> to vector<1x8x1x12xf32>
    tpu.vector_store %arg4[%c0_93, %c0_94, %c7_95, %c0_96], %137 {strides = array<i32>} : memref<1x8x12x12xf32, #tpu.memory_space<vmem>>, vector<1x8x1x12xf32>,
    %c0_97 = arith.constant 0 : index
    %c0_98 = arith.constant 0 : index
    %c10 = arith.constant 10 : index
    %c0_99 = arith.constant 0 : index
    %138 = vector.load %arg1[%c0_97, %c0_98, %c10, %c0_99] : memref<1x8x16x16xf32, #tpu.memory_space<vmem>>, vector<1x8x1x16xf32>
    %139 = vector.shape_cast %138 : vector<1x8x1x16xf32> to vector<8x16xf32>
    %cst_100 = arith.constant dense<0.000000e+00> : vector<8x16xf32>
    %140 = tpu.matmul %0, %139, %cst_100 {dimension_numbers = #tpu.dot_dimension_numbers<[1], [0], [0], [1], [0, 0, 1, 1], [], []>} : vector<8x8xf32>, vector<8x16xf32>, vector<8x16xf32> -> vector<8x16xf32>
    %141 = vector.broadcast %1 : vector<8x1xf32> to vector<8x16xf32>
    %142 = arith.addf %140, %141 : vector<8x16xf32>
    %cst_101 = arith.constant 3.000000e+00 : f32
    %143 = vector.broadcast %cst_101 : f32 to vector<8x16xf32>
    %144 = arith.addf %142, %143 : vector<8x16xf32>
    %cst_102 = arith.constant 0.000000e+00 : f32
    %cst_103 = arith.constant 6.000000e+00 : f32
    %145 = vector.broadcast %cst_102 : f32 to vector<8x16xf32>
    %146 = arith.maximumf %145, %144 : vector<8x16xf32>
    %147 = vector.broadcast %cst_103 : f32 to vector<8x16xf32>
    %148 = arith.minimumf %147, %146 : vector<8x16xf32>
    %cst_104 = arith.constant 0.166666672 : f32
    %149 = vector.broadcast %cst_104 : f32 to vector<8x16xf32>
    %150 = arith.mulf %148, %149 : vector<8x16xf32>
    %151 = vector.extract_strided_slice %150 {offsets = [0, 2], sizes = [8, 12], strides = [1, 1]} : vector<8x16xf32> to vector<8x12xf32>
    %c0_105 = arith.constant 0 : index
    %c0_106 = arith.constant 0 : index
    %c8_107 = arith.constant 8 : index
    %c0_108 = arith.constant 0 : index
    %152 = vector.load %arg4[%c0_105, %c0_106, %c8_107, %c0_108] : memref<1x8x12x12xf32, #tpu.memory_space<vmem>>, vector<1x8x1x12xf32>
    %153 = vector.shape_cast %152 : vector<1x8x1x12xf32> to vector<8x12xf32>
    %154 = vector.shape_cast %151 : vector<8x12xf32> to vector<1x8x1x12xf32>
    tpu.vector_store %arg4[%c0_105, %c0_106, %c8_107, %c0_108], %154 {strides = array<i32>} : memref<1x8x12x12xf32, #tpu.memory_space<vmem>>, vector<1x8x1x12xf32>,
    %c0_109 = arith.constant 0 : index
    %c0_110 = arith.constant 0 : index
    %c11 = arith.constant 11 : index
    %c0_111 = arith.constant 0 : index
    %155 = vector.load %arg1[%c0_109, %c0_110, %c11, %c0_111] : memref<1x8x16x16xf32, #tpu.memory_space<vmem>>, vector<1x8x1x16xf32>
    %156 = vector.shape_cast %155 : vector<1x8x1x16xf32> to vector<8x16xf32>
    %cst_112 = arith.constant dense<0.000000e+00> : vector<8x16xf32>
    %157 = tpu.matmul %0, %156, %cst_112 {dimension_numbers = #tpu.dot_dimension_numbers<[1], [0], [0], [1], [0, 0, 1, 1], [], []>} : vector<8x8xf32>, vector<8x16xf32>, vector<8x16xf32> -> vector<8x16xf32>
    %158 = vector.broadcast %1 : vector<8x1xf32> to vector<8x16xf32>
    %159 = arith.addf %157, %158 : vector<8x16xf32>
    %cst_113 = arith.constant 3.000000e+00 : f32
    %160 = vector.broadcast %cst_113 : f32 to vector<8x16xf32>
    %161 = arith.addf %159, %160 : vector<8x16xf32>
    %cst_114 = arith.constant 0.000000e+00 : f32
    %cst_115 = arith.constant 6.000000e+00 : f32
    %162 = vector.broadcast %cst_114 : f32 to vector<8x16xf32>
    %163 = arith.maximumf %162, %161 : vector<8x16xf32>
    %164 = vector.broadcast %cst_115 : f32 to vector<8x16xf32>
    %165 = arith.minimumf %164, %163 : vector<8x16xf32>
    %cst_116 = arith.constant 0.166666672 : f32
    %166 = vector.broadcast %cst_116 : f32 to vector<8x16xf32>
    %167 = arith.mulf %165, %166 : vector<8x16xf32>
    %168 = vector.extract_strided_slice %167 {offsets = [0, 2], sizes = [8, 12], strides = [1, 1]} : vector<8x16xf32> to vector<8x12xf32>
    %c0_117 = arith.constant 0 : index
    %c0_118 = arith.constant 0 : index
    %c9_119 = arith.constant 9 : index
    %c0_120 = arith.constant 0 : index
    %169 = vector.load %arg4[%c0_117, %c0_118, %c9_119, %c0_120] : memref<1x8x12x12xf32, #tpu.memory_space<vmem>>, vector<1x8x1x12xf32>
    %170 = vector.shape_cast %169 : vector<1x8x1x12xf32> to vector<8x12xf32>
    %171 = vector.shape_cast %168 : vector<8x12xf32> to vector<1x8x1x12xf32>
    tpu.vector_store %arg4[%c0_117, %c0_118, %c9_119, %c0_120], %171 {strides = array<i32>} : memref<1x8x12x12xf32, #tpu.memory_space<vmem>>, vector<1x8x1x12xf32>,
    %c0_121 = arith.constant 0 : index
    %c0_122 = arith.constant 0 : index
    %c12 = arith.constant 12 : index
    %c0_123 = arith.constant 0 : index
    %172 = vector.load %arg1[%c0_121, %c0_122, %c12, %c0_123] : memref<1x8x16x16xf32, #tpu.memory_space<vmem>>, vector<1x8x1x16xf32>
    %173 = vector.shape_cast %172 : vector<1x8x1x16xf32> to vector<8x16xf32>
    %cst_124 = arith.constant dense<0.000000e+00> : vector<8x16xf32>
    %174 = tpu.matmul %0, %173, %cst_124 {dimension_numbers = #tpu.dot_dimension_numbers<[1], [0], [0], [1], [0, 0, 1, 1], [], []>} : vector<8x8xf32>, vector<8x16xf32>, vector<8x16xf32> -> vector<8x16xf32>
    %175 = vector.broadcast %1 : vector<8x1xf32> to vector<8x16xf32>
    %176 = arith.addf %174, %175 : vector<8x16xf32>
    %cst_125 = arith.constant 3.000000e+00 : f32
    %177 = vector.broadcast %cst_125 : f32 to vector<8x16xf32>
    %178 = arith.addf %176, %177 : vector<8x16xf32>
    %cst_126 = arith.constant 0.000000e+00 : f32
    %cst_127 = arith.constant 6.000000e+00 : f32
    %179 = vector.broadcast %cst_126 : f32 to vector<8x16xf32>
    %180 = arith.maximumf %179, %178 : vector<8x16xf32>
    %181 = vector.broadcast %cst_127 : f32 to vector<8x16xf32>
    %182 = arith.minimumf %181, %180 : vector<8x16xf32>
    %cst_128 = arith.constant 0.166666672 : f32
    %183 = vector.broadcast %cst_128 : f32 to vector<8x16xf32>
    %184 = arith.mulf %182, %183 : vector<8x16xf32>
    %185 = vector.extract_strided_slice %184 {offsets = [0, 2], sizes = [8, 12], strides = [1, 1]} : vector<8x16xf32> to vector<8x12xf32>
    %c0_129 = arith.constant 0 : index
    %c0_130 = arith.constant 0 : index
    %c10_131 = arith.constant 10 : index
    %c0_132 = arith.constant 0 : index
    %186 = vector.load %arg4[%c0_129, %c0_130, %c10_131, %c0_132] : memref<1x8x12x12xf32, #tpu.memory_space<vmem>>, vector<1x8x1x12xf32>
    %187 = vector.shape_cast %186 : vector<1x8x1x12xf32> to vector<8x12xf32>
    %188 = vector.shape_cast %185 : vector<8x12xf32> to vector<1x8x1x12xf32>
    tpu.vector_store %arg4[%c0_129, %c0_130, %c10_131, %c0_132], %188 {strides = array<i32>} : memref<1x8x12x12xf32, #tpu.memory_space<vmem>>, vector<1x8x1x12xf32>,
    %c0_133 = arith.constant 0 : index
    %c0_134 = arith.constant 0 : index
    %c13 = arith.constant 13 : index
    %c0_135 = arith.constant 0 : index
    %189 = vector.load %arg1[%c0_133, %c0_134, %c13, %c0_135] : memref<1x8x16x16xf32, #tpu.memory_space<vmem>>, vector<1x8x1x16xf32>
    %190 = vector.shape_cast %189 : vector<1x8x1x16xf32> to vector<8x16xf32>
    %cst_136 = arith.constant dense<0.000000e+00> : vector<8x16xf32>
    %191 = tpu.matmul %0, %190, %cst_136 {dimension_numbers = #tpu.dot_dimension_numbers<[1], [0], [0], [1], [0, 0, 1, 1], [], []>} : vector<8x8xf32>, vector<8x16xf32>, vector<8x16xf32> -> vector<8x16xf32>
    %192 = vector.broadcast %1 : vector<8x1xf32> to vector<8x16xf32>
    %193 = arith.addf %191, %192 : vector<8x16xf32>
    %cst_137 = arith.constant 3.000000e+00 : f32
    %194 = vector.broadcast %cst_137 : f32 to vector<8x16xf32>
    %195 = arith.addf %193, %194 : vector<8x16xf32>
    %cst_138 = arith.constant 0.000000e+00 : f32
    %cst_139 = arith.constant 6.000000e+00 : f32
    %196 = vector.broadcast %cst_138 : f32 to vector<8x16xf32>
    %197 = arith.maximumf %196, %195 : vector<8x16xf32>
    %198 = vector.broadcast %cst_139 : f32 to vector<8x16xf32>
    %199 = arith.minimumf %198, %197 : vector<8x16xf32>
    %cst_140 = arith.constant 0.166666672 : f32
    %200 = vector.broadcast %cst_140 : f32 to vector<8x16xf32>
    %201 = arith.mulf %199, %200 : vector<8x16xf32>
    %202 = vector.extract_strided_slice %201 {offsets = [0, 2], sizes = [8, 12], strides = [1, 1]} : vector<8x16xf32> to vector<8x12xf32>
    %c0_141 = arith.constant 0 : index
    %c0_142 = arith.constant 0 : index
    %c11_143 = arith.constant 11 : index
    %c0_144 = arith.constant 0 : index
    %203 = vector.load %arg4[%c0_141, %c0_142, %c11_143, %c0_144] : memref<1x8x12x12xf32, #tpu.memory_space<vmem>>, vector<1x8x1x12xf32>
    %204 = vector.shape_cast %203 : vector<1x8x1x12xf32> to vector<8x12xf32>
    %205 = vector.shape_cast %202 : vector<8x12xf32> to vector<1x8x1x12xf32>
    tpu.vector_store %arg4[%c0_141, %c0_142, %c11_143, %c0_144], %205 {strides = array<i32>} : memref<1x8x12x12xf32, #tpu.memory_space<vmem>>, vector<1x8x1x12xf32>,
    return
  }
  func.func @transform_0(%arg0: i32) -> (i32, i32, i32, i32) {
    %c0_i32 = arith.constant 0 : i32
    %c0_i32_0 = arith.constant 0 : i32
    %c0_i32_1 = arith.constant 0 : i32
    %c0_i32_2 = arith.constant 0 : i32
    return %arg0, %c0_i32, %c0_i32_0, %c0_i32_1 : i32, i32, i32, i32
  }
  func.func @transform_1(%arg0: i32) -> (i32, i32) {
    %c0_i32 = arith.constant 0 : i32
    %c0_i32_0 = arith.constant 0 : i32
    %c0_i32_1 = arith.constant 0 : i32
    return %c0_i32, %c0_i32_0 : i32, i32
  }
  func.func @transform_2(%arg0: i32) -> (i32, i32) {
    %c0_i32 = arith.constant 0 : i32
    %c0_i32_0 = arith.constant 0 : i32
    %c0_i32_1 = arith.constant 0 : i32
    return %c0_i32, %c0_i32_0 : i32, i32
  }
  func.func @transform_3(%arg0: i32) -> (i32, i32, i32, i32) {
    %c0_i32 = arith.constant 0 : i32
    %c0_i32_0 = arith.constant 0 : i32
    %c0_i32_1 = arith.constant 0 : i32
    %c0_i32_2 = arith.constant 0 : i32
    return %arg0, %c0_i32, %c0_i32_0, %c0_i32_1 : i32, i32, i32, i32
  }
}

</mosaic_0001>

<llo_original>
// kernel: tpu_custom_call.1
$region0: #{tpu_custom_call.1}
  #allocation0 [shape = 'u32[]', space=smem, size = 0x4, offset = 0x4, fixed_abs, tag = 'smem constant byte address 0x4 - core index']
  #allocation1 [shape = 'u32[144,128]{1,0:T(1,128)}', space=vmem, size = 0x12000, scoped, tag = 'internal scratch']
  %s0 = inlined_call_operand.hbm [shape: f32[2,8,16,16], index: 0, kind: input, shape index: {}]
  %s1 = inlined_call_operand.vmem [shape: f32[8,8], index: 1, kind: input, shape index: {}]
  %s2 = inlined_call_operand.vmem [shape: f32[8,1], index: 2, kind: input, shape index: {}]
  %s3 = inlined_call_operand.vmem [shape: f32[2,8,12,12], index: 3, kind: output, shape index: {}]
  %s4 = sld [smem:[#allocation0]]
  $region49: #{tpu_custom_call.1} parent=0
    _
  %s6 = ssub.s32 1, %s4
  %s7 = scalar_select 0, %s6, %s4
  $region1: #{tpu_custom_call.1} parent=0
    #allocation2 [shape = 'u8[131072]{0}', space=vmem, size = 0x20000, scoped, tag = 'input window, operand 0']
    #allocation3 [shape = 's32[2]{0}', space=sflag, size = 0x8, scoped, tag = 'scoped memory for tpu_custom_call.1']
    %8 = vsyncpa [#allocation3], 0
    %s9 = scalar_lea.sflag [#allocation3], 1
    %10 = vsyncpa %s9, 0
    loop: start=0, step=1, limit=4
    $region2: #{tpu_custom_call.1} parent=1 // loop_pre_header
      _
    $region3: #{tpu_custom_call.1} parent=1 // loop_header
      %s12 = sphi 0, %s16
      %p13 = scmp.ge.s32.totalorder %s12, 4
      %s22 = sphi 0, %s24
      %s25 = sphi 0, %s22
      %s26 = sphi 0, %s25
      %s42 = sphi 0, %s26
      %s46 = sphi 0, %s46
      %s48 = sphi 0, %s46
      %s49 = sphi 0, %s48
      %s63 = sphi 0, %s49
      %s67 = sphi 0, %s67
      %s69 = sphi 0, %s67
      %s70 = sphi 0, %s69
      %s84 = sphi 0, %s70
      %s90 = sphi 0, %s92
      %s93 = sphi 0, %s90
      %s94 = sphi 0, %s93
      %s110 = sphi 0, %s94
    $region4: #{tpu_custom_call.1} parent=1 // loop_header_branch
      %15 = sbr.rel (%p13) target = $region8
    $region5: #{tpu_custom_call.1} parent=1 // loop_body
      %s17 = ssub.s32 %s12, 1
      %s18 = ssub.s32 %s12, 2
      %s19 = sadd.s32 %s12, 1
      %s20 = ssub.s32 %s12, %s19
      %p21 = scmp.eq.s32.totalorder %s20, 0
      %s23 = sadd.s32 %s22, 1
      %s24 = scalar_select %p21, %s22, %s23
      %p27 = pneg %p21
      %p28 = scmp.eq.s32.totalorder %s12, 1
      %p29 = por %p27, %p28
      %p30 = scmp.ne.s32.totalorder %s22, %s25
      %p31 = scmp.eq.s32.totalorder %s12, 0
      %p32 = por %p30, %p31
      %p33 = scmp.ne.s32.totalorder %s22, %s25
      %p34 = scmp.eq.s32.totalorder %s17, 1
      %p35 = por %p33, %p34
      %p36 = scmp.ne.s32.totalorder %s25, %s26
      %p37 = scmp.eq.s32.totalorder %s17, 0
      %p38 = por %p36, %p37
      %p39 = scmp.ne.s32.totalorder %s25, %s26
      %p40 = scmp.eq.s32.totalorder %s18, 1
      %p41 = por %p39, %p40
      %p43 = scmp.ne.s32.totalorder %s26, %s42
      %p44 = scmp.eq.s32.totalorder %s18, 0
      %p45 = por %p43, %p44
      %s47 = sadd.s32 %s46, 1
      %p50 = scmp.eq.s32.totalorder %s12, 1
      %p51 = scmp.ne.s32.totalorder %s46, %s48
      %p52 = scmp.eq.s32.totalorder %s12, 0
      %p53 = por %p51, %p52
      %p54 = scmp.ne.s32.totalorder %s46, %s48
      %p55 = scmp.eq.s32.totalorder %s17, 1
      %p56 = por %p54, %p55
      %p57 = scmp.ne.s32.totalorder %s48, %s49
      %p58 = scmp.eq.s32.totalorder %s17, 0
      %p59 = por %p57, %p58
      %p60 = scmp.ne.s32.totalorder %s48, %s49
      %p61 = scmp.eq.s32.totalorder %s18, 1
      %p62 = por %p60, %p61
      %p64 = scmp.ne.s32.totalorder %s49, %s63
      %p65 = scmp.eq.s32.totalorder %s18, 0
      %p66 = por %p64, %p65
      %s68 = sadd.s32 %s67, 1
      %p71 = scmp.eq.s32.totalorder %s12, 1
      %p72 = scmp.ne.s32.totalorder %s67, %s69
      %p73 = scmp.eq.s32.totalorder %s12, 0
      %p74 = por %p72, %p73
      %p75 = scmp.ne.s32.totalorder %s67, %s69
      %p76 = scmp.eq.s32.totalorder %s17, 1
      %p77 = por %p75, %p76
      %p78 = scmp.ne.s32.totalorder %s69, %s70
      %p79 = scmp.eq.s32.totalorder %s17, 0
      %p80 = por %p78, %p79
      %p81 = scmp.ne.s32.totalorder %s69, %s70
      %p82 = scmp.eq.s32.totalorder %s18, 1
      %p83 = por %p81, %p82
      %p85 = scmp.ne.s32.totalorder %s70, %s84
      %p86 = scmp.eq.s32.totalorder %s18, 0
      %p87 = por %p85, %p86
      %s88 = ssub.s32 %s12, %s19
      %p89 = scmp.eq.s32.totalorder %s88, 0
      %s91 = sadd.s32 %s90, 1
      %s92 = scalar_select %p89, %s90, %s91
      %p95 = pneg %p89
      %p96 = scmp.eq.s32.totalorder %s12, 1
      %p97 = por %p95, %p96
      %p98 = scmp.ne.s32.totalorder %s90, %s93
      %p99 = scmp.eq.s32.totalorder %s12, 0
      %p100 = por %p98, %p99
      %p101 = scmp.ne.s32.totalorder %s90, %s93
      %p102 = scmp.eq.s32.totalorder %s17, 1
      %p103 = por %p101, %p102
      %p104 = scmp.ne.s32.totalorder %s93, %s94
      %p105 = scmp.eq.s32.totalorder %s17, 0
      %p106 = por %p104, %p105
      %p107 = scmp.ne.s32.totalorder %s93, %s94
      %p108 = scmp.eq.s32.totalorder %s18, 1
      %p109 = por %p107, %p108
      %p111 = scmp.ne.s32.totalorder %s94, %s110
      %p112 = scmp.eq.s32.totalorder %s18, 0
      %p113 = por %p111, %p112
      %p114 = scmp.le.s32.totalorder 1, %s12
      %p115 = scmp.lt.s32.totalorder %s12, 3
      %p116 = pnand %p114, %p115
      %p117 = pneg %p116
      // Predicated region
      $region9: #{tpu_custom_call.1} parent=5 // pred_check
        _
      $region10: #{tpu_custom_call.1} parent=5 // pred_check_branch
        %119 = sbr.rel (%p116) target = $region12
      $region11: #{tpu_custom_call.1} parent=5 // pred_region
        %s120 = ssub.s32 %s12, 1
        // Predicated region
        $region13: #{tpu_custom_call.1} parent=11 // pred_check
          %p121 = pneg %p59
        $region14: #{tpu_custom_call.1} parent=11 // pred_check_branch
          %123 = sbr.rel (%p121) target = $region16
        $region15: #{tpu_custom_call.1} parent=11 // pred_region
          _
        $region16: #{tpu_custom_call.1} parent=11 // pred_fallthru
          _
        // Predicated region
        $region17: #{tpu_custom_call.1} parent=11 // pred_check
          %p124 = pneg %p80
        $region18: #{tpu_custom_call.1} parent=11 // pred_check_branch
          %126 = sbr.rel (%p124) target = $region20
        $region19: #{tpu_custom_call.1} parent=11 // pred_region
          _
        $region20: #{tpu_custom_call.1} parent=11 // pred_fallthru
          _
      $region12: #{tpu_custom_call.1} parent=5 // pred_fallthru
        _
      %p127 = scmp.lt.s32.totalorder %s12, 2
      // Predicated region
      $region21: #{tpu_custom_call.1} parent=5 // pred_check
        %p128 = pneg %p127
      $region22: #{tpu_custom_call.1} parent=5 // pred_check_branch
        %130 = sbr.rel (%p128) target = $region24
      $region23: #{tpu_custom_call.1} parent=5 // pred_region
        // Predicated region
        $region25: #{tpu_custom_call.1} parent=23 // pred_check
          %p131 = pneg %p32
        $region26: #{tpu_custom_call.1} parent=23 // pred_check_branch
          %133 = sbr.rel (%p131) target = $region28
        $region27: #{tpu_custom_call.1} parent=23 // pred_region
          %s134 = sand.u32 %s22, 1
          %s135 = scalar_lea.sflag [#allocation3], %s134
          %s136 = sand.u32 %s22, 1
          %s137 = smul.addr %s136, 128
          %s138 = scalar_lea.vmem [#allocation2], %s137
          %s140 = ssub.s32 2048, 2048
          %141 = vsyncadd %s135, %s140
          %s142 = smul.addr %s12, 16
          %s143 = smul.addr %s142, 128
          %s144 = scalar_lea.hbm %s0, %s143
          %s145 = sshll.u32 %s138, 4
          %s146 = int_to_ptr.vmem [resolvable:$true] %s145
          %151 = dma.hbm_to_vmem [thread:$0]  %s144, 2048, %s146, %s135, 128, 128, 8
        $region28: #{tpu_custom_call.1} parent=23 // pred_fallthru
          _
      $region24: #{tpu_custom_call.1} parent=5 // pred_fallthru
        _
      %p152 = scmp.le.s32.totalorder 1, %s12
      %p153 = scmp.lt.s32.totalorder %s12, 3
      %p154 = pnand %p152, %p153
      %p155 = pneg %p154
      // Predicated region
      $region29: #{tpu_custom_call.1} parent=5 // pred_check
        _
      $region30: #{tpu_custom_call.1} parent=5 // pred_check_branch
        %157 = sbr.rel (%p154) target = $region32
      $region31: #{tpu_custom_call.1} parent=5 // pred_region
        %s158 = ssub.s32 %s12, 1
        %s159 = sand.u32 %s25, 1
        %s160 = scalar_lea.sflag [#allocation3], %s159
        %s161 = sand.u32 %s25, 1
        %s162 = smul.addr %s161, 128
        %s163 = scalar_lea.vmem [#allocation2], %s162
        // Predicated region
        $region33: #{tpu_custom_call.1} parent=31 // pred_check
          %p164 = pneg %p38
        $region34: #{tpu_custom_call.1} parent=31 // pred_check_branch
          %166 = sbr.rel (%p164) target = $region36
        $region35: #{tpu_custom_call.1} parent=31 // pred_region
          %167 = dma.done %s160, 2048
        $region36: #{tpu_custom_call.1} parent=31 // pred_fallthru
          _
        %s168 = sand.u32 %s25, 1
        %s169 = scalar_lea.sflag [#allocation3], %s168
        %s170 = sand.u32 %s25, 1
        %s171 = smul.addr %s170, 128
        %s172 = scalar_lea.vmem [#allocation2], %s171
        %p173 = pneg %p38
        %p174 = pneg %p35
        %p175 = pneg %p59
        %p176 = pneg %p56
        %p177 = pneg %p80
        %p178 = pneg %p77
        %p179 = pneg %p106
        %p180 = pneg %p103
        %p181 = scmp.lt.s32.totalorder %s17, 1
        %s182 = scalar_select %p181, %s17, 1
        %s183 = smul.addr %s182, 16
        %s184 = smul.addr %s183, 8
        %s185 = scalar_lea.vmem %s3, %s184
        %p186 = scmp.lt.s32.totalorder %s17, 1
        %s187 = scalar_select %p186, %s17, 1
        %s188 = smul.addr %s187, 16
        %s189 = smul.addr %s188, 8
        %s190 = scalar_lea.vmem %s3, %s189
        %v191 = vld [vmem:[%s1] sm:$0xff]
        %v192 = vld [vmem:[%s2] sm:$0xff]
        %v193 = vld [vmem:[%s163 + $0x2] sm:$0x1]
        %v194 = vld [vmem:[%s163 + $0x12] sm:$0x1]
        %v195 = vld [vmem:[%s163 + $0x22] sm:$0x1]
        %v196 = vld [vmem:[%s163 + $0x32] sm:$0x1]
        %v197 = vld [vmem:[%s163 + $0x42] sm:$0x1]
        %v198 = vld [vmem:[%s163 + $0x52] sm:$0x1]
        %v199 = vld [vmem:[%s163 + $0x62] sm:$0x1]
        %v200 = vld [vmem:[%s163 + $0x72] sm:$0x1]
        %202 = vset.pattern.permute.xlu0 0
        %203 = vperm.xlu0 %202, %v192
        %v204 = vpop.permute.xlu0 %203
        %v214 = vrot.slane %v194, 7
        %vm215 = vcmask 1041409
        %v216 = vsel %vm215, %v214, %v193
        %v217 = vrot.slane %v195, 6
        %vm218 = vcmask 1042434
        %v219 = vsel %vm218, %v217, %v216
        %v220 = vrot.slane %v196, 5
        %vm221 = vcmask 1043459
        %v222 = vsel %vm221, %v220, %v219
        %v223 = vrot.slane %v197, 4
        %vm224 = vcmask 1044484
        %v225 = vsel %vm224, %v223, %v222
        %v226 = vrot.slane %v198, 3
        %vm227 = vcmask 1045509
        %v228 = vsel %vm227, %v226, %v225
        %v229 = vrot.slane %v199, 2
        %vm230 = vcmask 1046534
        %v231 = vsel %vm230, %v229, %v228
        %v232 = vrot.slane %v200, 1
        %vm233 = vcmask 1047559
        %v234 = vsel %vm233, %v232, %v231
        %vm236 = vcmask 64512
        %v238 = vsel %vm236, %v191, 0
        %240 = vmatprep.subr.mxu0 0.0
        %241 = vmatpush1.msra.mxu0 %v234
        %242 = vmatprep.subr.mxu0 0.0
        %243 = vmatpush1.msra.mxu0 0.0
        %244 = vmatprep.subr.mxu0 0.0
        %245 = vmatpush1.msra.mxu0 0.0
        %246 = vmatprep.subr.mxu0 0.0
        %247 = vmatpush1.msra.mxu0 0.0
        %248 = vmatprep.subr.mxu0 0.0
        %249 = vmatpush1.msra.mxu0 0.0
        %250 = vmatprep.subr.mxu0 0.0
        %251 = vmatpush1.msra.mxu0 0.0
        %252 = vmatprep.subr.mxu0 0.0
        %253 = vmatpush1.msra.mxu0 0.0
        %254 = vmatprep.subr.mxu0 0.0
        %255 = vmatpush1.msra.mxu0 0.0
        %256 = vmatprep.subr.mxu0 0.0
        %257 = vmatpush1.msra.mxu0 0.0
        %258 = vmatprep.subr.mxu0 0.0
        %259 = vmatpush1.msra.mxu0 0.0
        %260 = vmatprep.subr.mxu0 0.0
        %261 = vmatpush1.msra.mxu0 0.0
        %262 = vmatprep.subr.mxu0 0.0
        %263 = vmatpush1.msra.mxu0 0.0
        %264 = vmatprep.subr.mxu0 0.0
        %265 = vmatpush1.msra.mxu0 0.0
        %266 = vmatprep.subr.mxu0 0.0
        %267 = vmatpush1.msra.mxu0 0.0
        %268 = vmatprep.subr.mxu0 0.0
        %269 = vmatpush1.msra.mxu0 0.0
        %270 = vmatprep.subr.mxu0 0.0
        %271 = vmatpush1.msra.mxu0 0.0
        %272 = vmatprep.subr.mxu0 0.0
        %273 = vmatpush1.msra.mxu0 0.0
        %274 = vmatprep.subr.mxu0 0.0
        %275 = vmatpush1.msra.mxu0 0.0
        %276 = vmatprep.subr.mxu0 0.0
        %277 = vmatpush1.msra.mxu0 0.0
        %278 = vmatprep.subr.mxu0 0.0
        %279 = vmatpush1.msra.mxu0 0.0
        %280 = vmatprep.subr.mxu0 0.0
        %281 = vmatpush1.msra.mxu0 0.0
        %282 = vmatprep.subr.mxu0 0.0
        %283 = vmatpush1.msra.mxu0 0.0
        %284 = vmatprep.subr.mxu0 0.0
        %285 = vmatpush1.msra.mxu0 0.0
        %286 = vmatprep.subr.mxu0 0.0
        %287 = vmatpush1.msra.mxu0 0.0
        %288 = vmatprep.subr.mxu0 0.0
        %289 = vmatpush1.msra.mxu0 0.0
        %290 = vmatprep.subr.mxu0 0.0
        %291 = vmatpush1.msra.mxu0 0.0
        %292 = vmatprep.subr.mxu0 0.0
        %293 = vmatpush1.msra.mxu0 0.0
        %294 = vmatprep.subr.mxu0 0.0
        %295 = vmatpush1.msra.mxu0 0.0
        %296 = vmatprep.subr.mxu0 0.0
        %297 = vmatpush1.msra.mxu0 0.0
        %298 = vmatprep.subr.mxu0 0.0
        %299 = vmatpush1.msra.mxu0 0.0
        %300 = vmatprep.subr.mxu0 0.0
        %301 = vmatpush1.msra.mxu0 0.0
        %302 = vmatprep.subr.mxu0 0.0
        %303 = vmatpush1.msra.mxu0 0.0
        %304 = vmatprep.mubr.f32.mxu0 0.0
        %305 = vmatmul.mubr.f32.gmra.mrb[0].mxu0 %v238
        %v306 = vpop.f32.mrb[0].mxu0
        %v307 = vadd.f32 %v204, %v306
        %v308 = vpop.f32.mrb[0].mxu0
        %309 = vdwg.mxu0
        %v310 = vadd.f32 %v307, 3.0
        %v311 = vmax.f32 %v310, 0.0
        %v312 = vmin.f32 %v311, 6.0
        %v313 = vmul.f32 %v312, 0.16666667
        %v315 = vcombine.high %v313, %v313
        %v317 = vunpack.c.l.s4 1966171168
        %v318 = vunpack.c.0.s8 %v317
        %v319 = vlaneseq
        %v320 = vshrl.u32 %v319, 7
        %v321 = vsub.s32 %v318, %v320
        %v322 = vrot.slane %v313, %v321
        %v324 = vunpack.c.l.s4 1966171168
        %v325 = vunpack.c.0.s8 %v324
        %v326 = vlaneseq
        %v327 = vshrl.u32 %v326, 7
        %v328 = vsub.s32 %v325, %v327
        %v329 = vrot.slane %v315, %v328
        %v330 = vcombine.high %v322, %v322
        %v331 = vcombine.high %v329, %v329
        %v333 = vunpack.c.l.s4 1966171168
        %v334 = vunpack.c.0.s8 %v333
        %v335 = vlaneseq
        %v336 = vshrl.u32 %v335, 7
        %v337 = vsub.s32 %v334, %v336
        %v338 = vrot.slane %v322, %v337
        %v340 = vunpack.c.l.s4 1966171168
        %v341 = vunpack.c.0.s8 %v340
        %v342 = vlaneseq
        %v343 = vshrl.u32 %v342, 7
        %v344 = vsub.s32 %v341, %v343
        %v345 = vrot.slane %v329, %v344
        %v347 = vunpack.c.l.s4 1966171168
        %v348 = vunpack.c.0.s8 %v347
        %v349 = vlaneseq
        %v350 = vshrl.u32 %v349, 7
        %v351 = vsub.s32 %v348, %v350
        %v352 = vrot.slane %v330, %v351
        %v354 = vunpack.c.l.s4 1966171168
        %v355 = vunpack.c.0.s8 %v354
        %v356 = vlaneseq
        %v357 = vshrl.u32 %v356, 7
        %v358 = vsub.s32 %v355, %v357
        %v359 = vrot.slane %v331, %v358
        %v360 = vcombine.high %v338, %v338
        %v361 = vcombine.high %v345, %v345
        %v362 = vcombine.high %v352, %v352
        %v363 = vcombine.high %v359, %v359
        %v364 = vlaneseq
        %v365 = vshrl.u32 %v364, 7
        %v366 = vsub.s32 0, %v365
        %v367 = vrot.slane %v338, %v366
        %v368 = vlaneseq
        %v369 = vshrl.u32 %v368, 7
        %v370 = vsub.s32 0, %v369
        %v371 = vrot.slane %v352, %v370
        %v372 = vlaneseq
        %v373 = vshrl.u32 %v372, 7
        %v374 = vsub.s32 0, %v373
        %v375 = vrot.slane %v360, %v374
        %v376 = vlaneseq
        %v377 = vshrl.u32 %v376, 7
        %v378 = vsub.s32 0, %v377
        %v379 = vrot.slane %v362, %v378
        %v380 = vlaneseq
        %v381 = vshrl.u32 %v380, 7
        %v382 = vsub.s32 0, %v381
        %v383 = vrot.slane %v345, %v382
        %v384 = vlaneseq
        %v385 = vshrl.u32 %v384, 7
        %v386 = vsub.s32 0, %v385
        %v387 = vrot.slane %v359, %v386
        %v388 = vlaneseq
        %v389 = vshrl.u32 %v388, 7
        %v390 = vsub.s32 0, %v389
        %v391 = vrot.slane %v361, %v390
        %v392 = vlaneseq
        %v393 = vshrl.u32 %v392, 7
        %v394 = vsub.s32 0, %v393
        %v395 = vrot.slane %v363, %v394
        %396 = vrot.lane.b32.xlu0 %v367, 126
        %v397 = vpop.permute.xlu0 %396
        %398 = vrot.lane.b32.xlu0 %v371, 126
        %v399 = vpop.permute.xlu0 %398
        %400 = vrot.lane.b32.xlu0 %v375, 126
        %v401 = vpop.permute.xlu0 %400
        %402 = vrot.lane.b32.xlu0 %v379, 126
        %v403 = vpop.permute.xlu0 %402
        %404 = vrot.lane.b32.xlu0 %v383, 126
        %v405 = vpop.permute.xlu0 %404
        %406 = vrot.lane.b32.xlu0 %v387, 126
        %v407 = vpop.permute.xlu0 %406
        %408 = vrot.lane.b32.xlu0 %v391, 126
        %v409 = vpop.permute.xlu0 %408
        %410 = vrot.lane.b32.xlu0 %v395, 126
        %v411 = vpop.permute.xlu0 %410
        %vm420 = vcmask 90112
        %421 = vst.msk [vmem:[%s190] sm:$0x1] %vm420, %v397
        %422 = vst.msk [vmem:[%s190 + $0x10] sm:$0x1] %vm420, %v399
        %423 = vst.msk [vmem:[%s190 + $0x20] sm:$0x1] %vm420, %v401
        %424 = vst.msk [vmem:[%s190 + $0x30] sm:$0x1] %vm420, %v403
        %425 = vst.msk [vmem:[%s190 + $0x40] sm:$0x1] %vm420, %v405
        %426 = vst.msk [vmem:[%s190 + $0x50] sm:$0x1] %vm420, %v407
        %427 = vst.msk [vmem:[%s190 + $0x60] sm:$0x1] %vm420, %v409
        %428 = vst.msk [vmem:[%s190 + $0x70] sm:$0x1] %vm420, %v411
        %v429 = vld [vmem:[%s163 + $0x3] sm:$0x1]
        %v430 = vld [vmem:[%s163 + $0x13] sm:$0x1]
        %v431 = vld [vmem:[%s163 + $0x23] sm:$0x1]
        %v432 = vld [vmem:[%s163 + $0x33] sm:$0x1]
        %v433 = vld [vmem:[%s163 + $0x43] sm:$0x1]
        %v434 = vld [vmem:[%s163 + $0x53] sm:$0x1]
        %v435 = vld [vmem:[%s163 + $0x63] sm:$0x1]
        %v436 = vld [vmem:[%s163 + $0x73] sm:$0x1]
        %v445 = vrot.slane %v430, 7
        %v446 = vsel %vm215, %v445, %v429
        %v447 = vrot.slane %v431, 6
        %v448 = vsel %vm218, %v447, %v446
        %v449 = vrot.slane %v432, 5
        %v450 = vsel %vm221, %v449, %v448
        %v451 = vrot.slane %v433, 4
        %v452 = vsel %vm224, %v451, %v450
        %v453 = vrot.slane %v434, 3
        %v454 = vsel %vm227, %v453, %v452
        %v455 = vrot.slane %v435, 2
        %v456 = vsel %vm230, %v455, %v454
        %v457 = vrot.slane %v436, 1
        %v458 = vsel %vm233, %v457, %v456
        %460 = vmatprep.subr.mxu0 0.0
        %461 = vmatpush1.msra.mxu0 %v458
        %462 = vmatprep.subr.mxu0 0.0
        %463 = vmatpush1.msra.mxu0 0.0
        %464 = vmatprep.subr.mxu0 0.0
        %465 = vmatpush1.msra.mxu0 0.0
        %466 = vmatprep.subr.mxu0 0.0
        %467 = vmatpush1.msra.mxu0 0.0
        %468 = vmatprep.subr.mxu0 0.0
        %469 = vmatpush1.msra.mxu0 0.0
        %470 = vmatprep.subr.mxu0 0.0
        %471 = vmatpush1.msra.mxu0 0.0
        %472 = vmatprep.subr.mxu0 0.0
        %473 = vmatpush1.msra.mxu0 0.0
        %474 = vmatprep.subr.mxu0 0.0
        %475 = vmatpush1.msra.mxu0 0.0
        %476 = vmatprep.subr.mxu0 0.0
        %477 = vmatpush1.msra.mxu0 0.0
        %478 = vmatprep.subr.mxu0 0.0
        %479 = vmatpush1.msra.mxu0 0.0
        %480 = vmatprep.subr.mxu0 0.0
        %481 = vmatpush1.msra.mxu0 0.0
        %482 = vmatprep.subr.mxu0 0.0
        %483 = vmatpush1.msra.mxu0 0.0
        %484 = vmatprep.subr.mxu0 0.0
        %485 = vmatpush1.msra.mxu0 0.0
        %486 = vmatprep.subr.mxu0 0.0
        %487 = vmatpush1.msra.mxu0 0.0
        %488 = vmatprep.subr.mxu0 0.0
        %489 = vmatpush1.msra.mxu0 0.0
        %490 = vmatprep.subr.mxu0 0.0
        %491 = vmatpush1.msra.mxu0 0.0
        %492 = vmatprep.subr.mxu0 0.0
        %493 = vmatpush1.msra.mxu0 0.0
        %494 = vmatprep.subr.mxu0 0.0
        %495 = vmatpush1.msra.mxu0 0.0
        %496 = vmatprep.subr.mxu0 0.0
        %497 = vmatpush1.msra.mxu0 0.0
        %498 = vmatprep.subr.mxu0 0.0
        %499 = vmatpush1.msra.mxu0 0.0
        %500 = vmatprep.subr.mxu0 0.0
        %501 = vmatpush1.msra.mxu0 0.0
        %502 = vmatprep.subr.mxu0 0.0
        %503 = vmatpush1.msra.mxu0 0.0
        %504 = vmatprep.subr.mxu0 0.0
        %505 = vmatpush1.msra.mxu0 0.0
        %506 = vmatprep.subr.mxu0 0.0
        %507 = vmatpush1.msra.mxu0 0.0
        %508 = vmatprep.subr.mxu0 0.0
        %509 = vmatpush1.msra.mxu0 0.0
        %510 = vmatprep.subr.mxu0 0.0
        %511 = vmatpush1.msra.mxu0 0.0
        %512 = vmatprep.subr.mxu0 0.0
        %513 = vmatpush1.msra.mxu0 0.0
        %514 = vmatprep.subr.mxu0 0.0
        %515 = vmatpush1.msra.mxu0 0.0
        %516 = vmatprep.subr.mxu0 0.0
        %517 = vmatpush1.msra.mxu0 0.0
        %518 = vmatprep.subr.mxu0 0.0
        %519 = vmatpush1.msra.mxu0 0.0
        %520 = vmatprep.subr.mxu0 0.0
        %521 = vmatpush1.msra.mxu0 0.0
        %522 = vmatprep.subr.mxu0 0.0
        %523 = vmatpush1.msra.mxu0 0.0
        %524 = vmatprep.mubr.f32.mxu0 0.0
        %525 = vmatmul.mubr.f32.gmra.mrb[0].mxu0 %v238
        %v526 = vpop.f32.mrb[0].mxu0
        %v527 = vadd.f32 %v204, %v526
        %v528 = vpop.f32.mrb[0].mxu0
        %529 = vdwg.mxu0
        %v530 = vadd.f32 %v527, 3.0
        %v531 = vmax.f32 %v530, 0.0
        %v532 = vmin.f32 %v531, 6.0
        %v533 = vmul.f32 %v532, 0.16666667
        %v535 = vcombine.high %v533, %v533
        %v537 = vunpack.c.l.s4 1966171168
        %v538 = vunpack.c.0.s8 %v537
        %v539 = vlaneseq
        %v540 = vshrl.u32 %v539, 7
        %v541 = vsub.s32 %v538, %v540
        %v542 = vrot.slane %v533, %v541
        %v544 = vunpack.c.l.s4 1966171168
        %v545 = vunpack.c.0.s8 %v544
        %v546 = vlaneseq
        %v547 = vshrl.u32 %v546, 7
        %v548 = vsub.s32 %v545, %v547
        %v549 = vrot.slane %v535, %v548
        %v550 = vcombine.high %v542, %v542
        %v551 = vcombine.high %v549, %v549
        %v553 = vunpack.c.l.s4 1966171168
        %v554 = vunpack.c.0.s8 %v553
        %v555 = vlaneseq
        %v556 = vshrl.u32 %v555, 7
        %v557 = vsub.s32 %v554, %v556
        %v558 = vrot.slane %v542, %v557
        %v560 = vunpack.c.l.s4 1966171168
        %v561 = vunpack.c.0.s8 %v560
        %v562 = vlaneseq
        %v563 = vshrl.u32 %v562, 7
        %v564 = vsub.s32 %v561, %v563
        %v565 = vrot.slane %v549, %v564
        %v567 = vunpack.c.l.s4 1966171168
        %v568 = vunpack.c.0.s8 %v567
        %v569 = vlaneseq
        %v570 = vshrl.u32 %v569, 7
        %v571 = vsub.s32 %v568, %v570
        %v572 = vrot.slane %v550, %v571
        %v574 = vunpack.c.l.s4 1966171168
        %v575 = vunpack.c.0.s8 %v574
        %v576 = vlaneseq
        %v577 = vshrl.u32 %v576, 7
        %v578 = vsub.s32 %v575, %v577
        %v579 = vrot.slane %v551, %v578
        %v580 = vcombine.high %v558, %v558
        %v581 = vcombine.high %v565, %v565
        %v582 = vcombine.high %v572, %v572
        %v583 = vcombine.high %v579, %v579
        %v584 = vlaneseq
        %v585 = vshrl.u32 %v584, 7
        %v586 = vsub.s32 0, %v585
        %v587 = vrot.slane %v558, %v586
        %v588 = vlaneseq
        %v589 = vshrl.u32 %v588, 7
        %v590 = vsub.s32 0, %v589
        %v591 = vrot.slane %v572, %v590
        %v592 = vlaneseq
        %v593 = vshrl.u32 %v592, 7
        %v594 = vsub.s32 0, %v593
        %v595 = vrot.slane %v580, %v594
        %v596 = vlaneseq
        %v597 = vshrl.u32 %v596, 7
        %v598 = vsub.s32 0, %v597
        %v599 = vrot.slane %v582, %v598
        %v600 = vlaneseq
        %v601 = vshrl.u32 %v600, 7
        %v602 = vsub.s32 0, %v601
        %v603 = vrot.slane %v565, %v602
        %v604 = vlaneseq
        %v605 = vshrl.u32 %v604, 7
        %v606 = vsub.s32 0, %v605
        %v607 = vrot.slane %v579, %v606
        %v608 = vlaneseq
        %v609 = vshrl.u32 %v608, 7
        %v610 = vsub.s32 0, %v609
        %v611 = vrot.slane %v581, %v610
        %v612 = vlaneseq
        %v613 = vshrl.u32 %v612, 7
        %v614 = vsub.s32 0, %v613
        %v615 = vrot.slane %v583, %v614
        %616 = vrot.lane.b32.xlu0 %v587, 126
        %v617 = vpop.permute.xlu0 %616
        %618 = vrot.lane.b32.xlu0 %v591, 126
        %v619 = vpop.permute.xlu0 %618
        %620 = vrot.lane.b32.xlu0 %v595, 126
        %v621 = vpop.permute.xlu0 %620
        %622 = vrot.lane.b32.xlu0 %v599, 126
        %v623 = vpop.permute.xlu0 %622
        %624 = vrot.lane.b32.xlu0 %v603, 126
        %v625 = vpop.permute.xlu0 %624
        %626 = vrot.lane.b32.xlu0 %v607, 126
        %v627 = vpop.permute.xlu0 %626
        %628 = vrot.lane.b32.xlu0 %v611, 126
        %v629 = vpop.permute.xlu0 %628
        %630 = vrot.lane.b32.xlu0 %v615, 126
        %v631 = vpop.permute.xlu0 %630
        %640 = vst.msk [vmem:[%s190 + $0x1] sm:$0x1] %vm420, %v617
        %641 = vst.msk [vmem:[%s190 + $0x11] sm:$0x1] %vm420, %v619
        %642 = vst.msk [vmem:[%s190 + $0x21] sm:$0x1] %vm420, %v621
        %643 = vst.msk [vmem:[%s190 + $0x31] sm:$0x1] %vm420, %v623
        %644 = vst.msk [vmem:[%s190 + $0x41] sm:$0x1] %vm420, %v625
        %645 = vst.msk [vmem:[%s190 + $0x51] sm:$0x1] %vm420, %v627
        %646 = vst.msk [vmem:[%s190 + $0x61] sm:$0x1] %vm420, %v629
        %647 = vst.msk [vmem:[%s190 + $0x71] sm:$0x1] %vm420, %v631
        %v648 = vld [vmem:[%s163 + $0x4] sm:$0x1]
        %v649 = vld [vmem:[%s163 + $0x14] sm:$0x1]
        %v650 = vld [vmem:[%s163 + $0x24] sm:$0x1]
        %v651 = vld [vmem:[%s163 + $0x34] sm:$0x1]
        %v652 = vld [vmem:[%s163 + $0x44] sm:$0x1]
        %v653 = vld [vmem:[%s163 + $0x54] sm:$0x1]
        %v654 = vld [vmem:[%s163 + $0x64] sm:$0x1]
        %v655 = vld [vmem:[%s163 + $0x74] sm:$0x1]
        %v664 = vrot.slane %v649, 7
        %v665 = vsel %vm215, %v664, %v648
        %v666 = vrot.slane %v650, 6
        %v667 = vsel %vm218, %v666, %v665
        %v668 = vrot.slane %v651, 5
        %v669 = vsel %vm221, %v668, %v667
        %v670 = vrot.slane %v652, 4
        %v671 = vsel %vm224, %v670, %v669
        %v672 = vrot.slane %v653, 3
        %v673 = vsel %vm227, %v672, %v671
        %v674 = vrot.slane %v654, 2
        %v675 = vsel %vm230, %v674, %v673
        %v676 = vrot.slane %v655, 1
        %v677 = vsel %vm233, %v676, %v675
        %679 = vmatprep.subr.mxu0 0.0
        %680 = vmatpush1.msra.mxu0 %v677
        %681 = vmatprep.subr.mxu0 0.0
        %682 = vmatpush1.msra.mxu0 0.0
        %683 = vmatprep.subr.mxu0 0.0
        %684 = vmatpush1.msra.mxu0 0.0
        %685 = vmatprep.subr.mxu0 0.0
        %686 = vmatpush1.msra.mxu0 0.0
        %687 = vmatprep.subr.mxu0 0.0
        %688 = vmatpush1.msra.mxu0 0.0
        %689 = vmatprep.subr.mxu0 0.0
        %690 = vmatpush1.msra.mxu0 0.0
        %691 = vmatprep.subr.mxu0 0.0
        %692 = vmatpush1.msra.mxu0 0.0
        %693 = vmatprep.subr.mxu0 0.0
        %694 = vmatpush1.msra.mxu0 0.0
        %695 = vmatprep.subr.mxu0 0.0
        %696 = vmatpush1.msra.mxu0 0.0
        %697 = vmatprep.subr.mxu0 0.0
        %698 = vmatpush1.msra.mxu0 0.0
        %699 = vmatprep.subr.mxu0 0.0
        %700 = vmatpush1.msra.mxu0 0.0
        %701 = vmatprep.subr.mxu0 0.0
        %702 = vmatpush1.msra.mxu0 0.0
        %703 = vmatprep.subr.mxu0 0.0
        %704 = vmatpush1.msra.mxu0 0.0
        %705 = vmatprep.subr.mxu0 0.0
        %706 = vmatpush1.msra.mxu0 0.0
        %707 = vmatprep.subr.mxu0 0.0
        %708 = vmatpush1.msra.mxu0 0.0
        %709 = vmatprep.subr.mxu0 0.0
        %710 = vmatpush1.msra.mxu0 0.0
        %711 = vmatprep.subr.mxu0 0.0
        %712 = vmatpush1.msra.mxu0 0.0
        %713 = vmatprep.subr.mxu0 0.0
        %714 = vmatpush1.msra.mxu0 0.0
        %715 = vmatprep.subr.mxu0 0.0
        %716 = vmatpush1.msra.mxu0 0.0
        %717 = vmatprep.subr.mxu0 0.0
        %718 = vmatpush1.msra.mxu0 0.0
        %719 = vmatprep.subr.mxu0 0.0
        %720 = vmatpush1.msra.mxu0 0.0
        %721 = vmatprep.subr.mxu0 0.0
        %722 = vmatpush1.msra.mxu0 0.0
        %723 = vmatprep.subr.mxu0 0.0
        %724 = vmatpush1.msra.mxu0 0.0
        %725 = vmatprep.subr.mxu0 0.0
        %726 = vmatpush1.msra.mxu0 0.0
        %727 = vmatprep.subr.mxu0 0.0
        %728 = vmatpush1.msra.mxu0 0.0
        %729 = vmatprep.subr.mxu0 0.0
        %730 = vmatpush1.msra.mxu0 0.0
        %731 = vmatprep.subr.mxu0 0.0
        %732 = vmatpush1.msra.mxu0 0.0
        %733 = vmatprep.subr.mxu0 0.0
        %734 = vmatpush1.msra.mxu0 0.0
        %735 = vmatprep.subr.mxu0 0.0
        %736 = vmatpush1.msra.mxu0 0.0
        %737 = vmatprep.subr.mxu0 0.0
        %738 = vmatpush1.msra.mxu0 0.0
        %739 = vmatprep.subr.mxu0 0.0
        %740 = vmatpush1.msra.mxu0 0.0
        %741 = vmatprep.subr.mxu0 0.0
        %742 = vmatpush1.msra.mxu0 0.0
        %743 = vmatprep.mubr.f32.mxu0 0.0
        %744 = vmatmul.mubr.f32.gmra.mrb[0].mxu0 %v238
        %v745 = vpop.f32.mrb[0].mxu0
        %v746 = vadd.f32 %v204, %v745
        %v747 = vpop.f32.mrb[0].mxu0
        %748 = vdwg.mxu0
        %v749 = vadd.f32 %v746, 3.0
        %v750 = vmax.f32 %v749, 0.0
        %v751 = vmin.f32 %v750, 6.0
        %v752 = vmul.f32 %v751, 0.16666667
        %v754 = vcombine.high %v752, %v752
        %v756 = vunpack.c.l.s4 1966171168
        %v757 = vunpack.c.0.s8 %v756
        %v758 = vlaneseq
        %v759 = vshrl.u32 %v758, 7
        %v760 = vsub.s32 %v757, %v759
        %v761 = vrot.slane %v752, %v760
        %v763 = vunpack.c.l.s4 1966171168
        %v764 = vunpack.c.0.s8 %v763
        %v765 = vlaneseq
        %v766 = vshrl.u32 %v765, 7
        %v767 = vsub.s32 %v764, %v766
        %v768 = vrot.slane %v754, %v767
        %v769 = vcombine.high %v761, %v761
        %v770 = vcombine.high %v768, %v768
        %v772 = vunpack.c.l.s4 1966171168
        %v773 = vunpack.c.0.s8 %v772
        %v774 = vlaneseq
        %v775 = vshrl.u32 %v774, 7
        %v776 = vsub.s32 %v773, %v775
        %v777 = vrot.slane %v761, %v776
        %v779 = vunpack.c.l.s4 1966171168
        %v780 = vunpack.c.0.s8 %v779
        %v781 = vlaneseq
        %v782 = vshrl.u32 %v781, 7
        %v783 = vsub.s32 %v780, %v782
        %v784 = vrot.slane %v768, %v783
        %v786 = vunpack.c.l.s4 1966171168
        %v787 = vunpack.c.0.s8 %v786
        %v788 = vlaneseq
        %v789 = vshrl.u32 %v788, 7
        %v790 = vsub.s32 %v787, %v789
        %v791 = vrot.slane %v769, %v790
        %v793 = vunpack.c.l.s4 1966171168
        %v794 = vunpack.c.0.s8 %v793
        %v795 = vlaneseq
        %v796 = vshrl.u32 %v795, 7
        %v797 = vsub.s32 %v794, %v796
        %v798 = vrot.slane %v770, %v797
        %v799 = vcombine.high %v777, %v777
        %v800 = vcombine.high %v784, %v784
        %v801 = vcombine.high %v791, %v791
        %v802 = vcombine.high %v798, %v798
        %v803 = vlaneseq
        %v804 = vshrl.u32 %v803, 7
        %v805 = vsub.s32 0, %v804
        %v806 = vrot.slane %v777, %v805
        %v807 = vlaneseq
        %v808 = vshrl.u32 %v807, 7
        %v809 = vsub.s32 0, %v808
        %v810 = vrot.slane %v791, %v809
        %v811 = vlaneseq
        %v812 = vshrl.u32 %v811, 7
        %v813 = vsub.s32 0, %v812
        %v814 = vrot.slane %v799, %v813
        %v815 = vlaneseq
        %v816 = vshrl.u32 %v815, 7
        %v817 = vsub.s32 0, %v816
        %v818 = vrot.slane %v801, %v817
        %v819 = vlaneseq
        %v820 = vshrl.u32 %v819, 7
        %v821 = vsub.s32 0, %v820
        %v822 = vrot.slane %v784, %v821
        %v823 = vlaneseq
        %v824 = vshrl.u32 %v823, 7
        %v825 = vsub.s32 0, %v824
        %v826 = vrot.slane %v798, %v825
        %v827 = vlaneseq
        %v828 = vshrl.u32 %v827, 7
        %v829 = vsub.s32 0, %v828
        %v830 = vrot.slane %v800, %v829
        %v831 = vlaneseq
        %v832 = vshrl.u32 %v831, 7
        %v833 = vsub.s32 0, %v832
        %v834 = vrot.slane %v802, %v833
        %835 = vrot.lane.b32.xlu0 %v806, 126
        %v836 = vpop.permute.xlu0 %835
        %837 = vrot.lane.b32.xlu0 %v810, 126
        %v838 = vpop.permute.xlu0 %837
        %839 = vrot.lane.b32.xlu0 %v814, 126
        %v840 = vpop.permute.xlu0 %839
        %841 = vrot.lane.b32.xlu0 %v818, 126
        %v842 = vpop.permute.xlu0 %841
        %843 = vrot.lane.b32.xlu0 %v822, 126
        %v844 = vpop.permute.xlu0 %843
        %845 = vrot.lane.b32.xlu0 %v826, 126
        %v846 = vpop.permute.xlu0 %845
        %847 = vrot.lane.b32.xlu0 %v830, 126
        %v848 = vpop.permute.xlu0 %847
        %849 = vrot.lane.b32.xlu0 %v834, 126
        %v850 = vpop.permute.xlu0 %849
        %859 = vst.msk [vmem:[%s190 + $0x2] sm:$0x1] %vm420, %v836
        %860 = vst.msk [vmem:[%s190 + $0x12] sm:$0x1] %vm420, %v838
        %861 = vst.msk [vmem:[%s190 + $0x22] sm:$0x1] %vm420, %v840
        %862 = vst.msk [vmem:[%s190 + $0x32] sm:$0x1] %vm420, %v842
        %863 = vst.msk [vmem:[%s190 + $0x42] sm:$0x1] %vm420, %v844
        %864 = vst.msk [vmem:[%s190 + $0x52] sm:$0x1] %vm420, %v846
        %865 = vst.msk [vmem:[%s190 + $0x62] sm:$0x1] %vm420, %v848
        %866 = vst.msk [vmem:[%s190 + $0x72] sm:$0x1] %vm420, %v850
        %v867 = vld [vmem:[%s163 + $0x5] sm:$0x1]
        %v868 = vld [vmem:[%s163 + $0x15] sm:$0x1]
        %v869 = vld [vmem:[%s163 + $0x25] sm:$0x1]
        %v870 = vld [vmem:[%s163 + $0x35] sm:$0x1]
        %v871 = vld [vmem:[%s163 + $0x45] sm:$0x1]
        %v872 = vld [vmem:[%s163 + $0x55] sm:$0x1]
        %v873 = vld [vmem:[%s163 + $0x65] sm:$0x1]
        %v874 = vld [vmem:[%s163 + $0x75] sm:$0x1]
        %v883 = vrot.slane %v868, 7
        %v884 = vsel %vm215, %v883, %v867
        %v885 = vrot.slane %v869, 6
        %v886 = vsel %vm218, %v885, %v884
        %v887 = vrot.slane %v870, 5
        %v888 = vsel %vm221, %v887, %v886
        %v889 = vrot.slane %v871, 4
        %v890 = vsel %vm224, %v889, %v888
        %v891 = vrot.slane %v872, 3
        %v892 = vsel %vm227, %v891, %v890
        %v893 = vrot.slane %v873, 2
        %v894 = vsel %vm230, %v893, %v892
        %v895 = vrot.slane %v874, 1
        %v896 = vsel %vm233, %v895, %v894
        %898 = vmatprep.subr.mxu0 0.0
        %899 = vmatpush1.msra.mxu0 %v896
        %900 = vmatprep.subr.mxu0 0.0
        %901 = vmatpush1.msra.mxu0 0.0
        %902 = vmatprep.subr.mxu0 0.0
        %903 = vmatpush1.msra.mxu0 0.0
        %904 = vmatprep.subr.mxu0 0.0
        %905 = vmatpush1.msra.mxu0 0.0
        %906 = vmatprep.subr.mxu0 0.0
        %907 = vmatpush1.msra.mxu0 0.0
        %908 = vmatprep.subr.mxu0 0.0
        %909 = vmatpush1.msra.mxu0 0.0
        %910 = vmatprep.subr.mxu0 0.0
        %911 = vmatpush1.msra.mxu0 0.0
        %912 = vmatprep.subr.mxu0 0.0
        %913 = vmatpush1.msra.mxu0 0.0
        %914 = vmatprep.subr.mxu0 0.0
        %915 = vmatpush1.msra.mxu0 0.0
        %916 = vmatprep.subr.mxu0 0.0
        %917 = vmatpush1.msra.mxu0 0.0
        %918 = vmatprep.subr.mxu0 0.0
        %919 = vmatpush1.msra.mxu0 0.0
        %920 = vmatprep.subr.mxu0 0.0
        %921 = vmatpush1.msra.mxu0 0.0
        %922 = vmatprep.subr.mxu0 0.0
        %923 = vmatpush1.msra.mxu0 0.0
        %924 = vmatprep.subr.mxu0 0.0
        %925 = vmatpush1.msra.mxu0 0.0
        %926 = vmatprep.subr.mxu0 0.0
        %927 = vmatpush1.msra.mxu0 0.0
        %928 = vmatprep.subr.mxu0 0.0
        %929 = vmatpush1.msra.mxu0 0.0
        %930 = vmatprep.subr.mxu0 0.0
        %931 = vmatpush1.msra.mxu0 0.0
        %932 = vmatprep.subr.mxu0 0.0
        %933 = vmatpush1.msra.mxu0 0.0
        %934 = vmatprep.subr.mxu0 0.0
        %935 = vmatpush1.msra.mxu0 0.0
        %936 = vmatprep.subr.mxu0 0.0
        %937 = vmatpush1.msra.mxu0 0.0
        %938 = vmatprep.subr.mxu0 0.0
        %939 = vmatpush1.msra.mxu0 0.0
        %940 = vmatprep.subr.mxu0 0.0
        %941 = vmatpush1.msra.mxu0 0.0
        %942 = vmatprep.subr.mxu0 0.0
        %943 = vmatpush1.msra.mxu0 0.0
        %944 = vmatprep.subr.mxu0 0.0
        %945 = vmatpush1.msra.mxu0 0.0
        %946 = vmatprep.subr.mxu0 0.0
        %947 = vmatpush1.msra.mxu0 0.0
        %948 = vmatprep.subr.mxu0 0.0
        %949 = vmatpush1.msra.mxu0 0.0
        %950 = vmatprep.subr.mxu0 0.0
        %951 = vmatpush1.msra.mxu0 0.0
        %952 = vmatprep.subr.mxu0 0.0
        %953 = vmatpush1.msra.mxu0 0.0
        %954 = vmatprep.subr.mxu0 0.0
        %955 = vmatpush1.msra.mxu0 0.0
        %956 = vmatprep.subr.mxu0 0.0
        %957 = vmatpush1.msra.mxu0 0.0
        %958 = vmatprep.subr.mxu0 0.0
        %959 = vmatpush1.msra.mxu0 0.0
        %960 = vmatprep.subr.mxu0 0.0
        %961 = vmatpush1.msra.mxu0 0.0
        %962 = vmatprep.mubr.f32.mxu0 0.0
        %963 = vmatmul.mubr.f32.gmra.mrb[0].mxu0 %v238
        %v964 = vpop.f32.mrb[0].mxu0
        %v965 = vadd.f32 %v204, %v964
        %v966 = vpop.f32.mrb[0].mxu0
        %967 = vdwg.mxu0
        %v968 = vadd.f32 %v965, 3.0
        %v969 = vmax.f32 %v968, 0.0
        %v970 = vmin.f32 %v969, 6.0
        %v971 = vmul.f32 %v970, 0.16666667
        %v973 = vcombine.high %v971, %v971
        %v975 = vunpack.c.l.s4 1966171168
        %v976 = vunpack.c.0.s8 %v975
        %v977 = vlaneseq
        %v978 = vshrl.u32 %v977, 7
        %v979 = vsub.s32 %v976, %v978
        %v980 = vrot.slane %v971, %v979
        %v982 = vunpack.c.l.s4 1966171168
        %v983 = vunpack.c.0.s8 %v982
        %v984 = vlaneseq
        %v985 = vshrl.u32 %v984, 7
        %v986 = vsub.s32 %v983, %v985
        %v987 = vrot.slane %v973, %v986
        %v988 = vcombine.high %v980, %v980
        %v989 = vcombine.high %v987, %v987
        %v991 = vunpack.c.l.s4 1966171168
        %v992 = vunpack.c.0.s8 %v991
        %v993 = vlaneseq
        %v994 = vshrl.u32 %v993, 7
        %v995 = vsub.s32 %v992, %v994
        %v996 = vrot.slane %v980, %v995
        %v998 = vunpack.c.l.s4 1966171168
        %v999 = vunpack.c.0.s8 %v998
        %v1000 = vlaneseq
        %v1001 = vshrl.u32 %v1000, 7
        %v1002 = vsub.s32 %v999, %v1001
        %v1003 = vrot.slane %v987, %v1002
        %v1005 = vunpack.c.l.s4 1966171168
        %v1006 = vunpack.c.0.s8 %v1005
        %v1007 = vlaneseq
        %v1008 = vshrl.u32 %v1007, 7
        %v1009 = vsub.s32 %v1006, %v1008
        %v1010 = vrot.slane %v988, %v1009
        %v1012 = vunpack.c.l.s4 1966171168
        %v1013 = vunpack.c.0.s8 %v1012
        %v1014 = vlaneseq
        %v1015 = vshrl.u32 %v1014, 7
        %v1016 = vsub.s32 %v1013, %v1015
        %v1017 = vrot.slane %v989, %v1016
        %v1018 = vcombine.high %v996, %v996
        %v1019 = vcombine.high %v1003, %v1003
        %v1020 = vcombine.high %v1010, %v1010
        %v1021 = vcombine.high %v1017, %v1017
        %v1022 = vlaneseq
        %v1023 = vshrl.u32 %v1022, 7
        %v1024 = vsub.s32 0, %v1023
        %v1025 = vrot.slane %v996, %v1024
        %v1026 = vlaneseq
        %v1027 = vshrl.u32 %v1026, 7
        %v1028 = vsub.s32 0, %v1027
        %v1029 = vrot.slane %v1010, %v1028
        %v1030 = vlaneseq
        %v1031 = vshrl.u32 %v1030, 7
        %v1032 = vsub.s32 0, %v1031
        %v1033 = vrot.slane %v1018, %v1032
        %v1034 = vlaneseq
        %v1035 = vshrl.u32 %v1034, 7
        %v1036 = vsub.s32 0, %v1035
        %v1037 = vrot.slane %v1020, %v1036
        %v1038 = vlaneseq
        %v1039 = vshrl.u32 %v1038, 7
        %v1040 = vsub.s32 0, %v1039
        %v1041 = vrot.slane %v1003, %v1040
        %v1042 = vlaneseq
        %v1043 = vshrl.u32 %v1042, 7
        %v1044 = vsub.s32 0, %v1043
        %v1045 = vrot.slane %v1017, %v1044
        %v1046 = vlaneseq
        %v1047 = vshrl.u32 %v1046, 7
        %v1048 = vsub.s32 0, %v1047
        %v1049 = vrot.slane %v1019, %v1048
        %v1050 = vlaneseq
        %v1051 = vshrl.u32 %v1050, 7
        %v1052 = vsub.s32 0, %v1051
        %v1053 = vrot.slane %v1021, %v1052
        %1054 = vrot.lane.b32.xlu0 %v1025, 126
        %v1055 = vpop.permute.xlu0 %1054
        %1056 = vrot.lane.b32.xlu0 %v1029, 126
        %v1057 = vpop.permute.xlu0 %1056
        %1058 = vrot.lane.b32.xlu0 %v1033, 126
        %v1059 = vpop.permute.xlu0 %1058
        %1060 = vrot.lane.b32.xlu0 %v1037, 126
        %v1061 = vpop.permute.xlu0 %1060
        %1062 = vrot.lane.b32.xlu0 %v1041, 126
        %v1063 = vpop.permute.xlu0 %1062
        %1064 = vrot.lane.b32.xlu0 %v1045, 126
        %v1065 = vpop.permute.xlu0 %1064
        %1066 = vrot.lane.b32.xlu0 %v1049, 126
        %v1067 = vpop.permute.xlu0 %1066
        %1068 = vrot.lane.b32.xlu0 %v1053, 126
        %v1069 = vpop.permute.xlu0 %1068
        %1078 = vst.msk [vmem:[%s190 + $0x3] sm:$0x1] %vm420, %v1055
        %1079 = vst.msk [vmem:[%s190 + $0x13] sm:$0x1] %vm420, %v1057
        %1080 = vst.msk [vmem:[%s190 + $0x23] sm:$0x1] %vm420, %v1059
        %1081 = vst.msk [vmem:[%s190 + $0x33] sm:$0x1] %vm420, %v1061
        %1082 = vst.msk [vmem:[%s190 + $0x43] sm:$0x1] %vm420, %v1063
        %1083 = vst.msk [vmem:[%s190 + $0x53] sm:$0x1] %vm420, %v1065
        %1084 = vst.msk [vmem:[%s190 + $0x63] sm:$0x1] %vm420, %v1067
        %1085 = vst.msk [vmem:[%s190 + $0x73] sm:$0x1] %vm420, %v1069
        %v1086 = vld [vmem:[%s163 + $0x6] sm:$0x1]
        %v1087 = vld [vmem:[%s163 + $0x16] sm:$0x1]
        %v1088 = vld [vmem:[%s163 + $0x26] sm:$0x1]
        %v1089 = vld [vmem:[%s163 + $0x36] sm:$0x1]
        %v1090 = vld [vmem:[%s163 + $0x46] sm:$0x1]
        %v1091 = vld [vmem:[%s163 + $0x56] sm:$0x1]
        %v1092 = vld [vmem:[%s163 + $0x66] sm:$0x1]
        %v1093 = vld [vmem:[%s163 + $0x76] sm:$0x1]
        %v1102 = vrot.slane %v1087, 7
        %v1103 = vsel %vm215, %v1102, %v1086
        %v1104 = vrot.slane %v1088, 6
        %v1105 = vsel %vm218, %v1104, %v1103
        %v1106 = vrot.slane %v1089, 5
        %v1107 = vsel %vm221, %v1106, %v1105
        %v1108 = vrot.slane %v1090, 4
        %v1109 = vsel %vm224, %v1108, %v1107
        %v1110 = vrot.slane %v1091, 3
        %v1111 = vsel %vm227, %v1110, %v1109
        %v1112 = vrot.slane %v1092, 2
        %v1113 = vsel %vm230, %v1112, %v1111
        %v1114 = vrot.slane %v1093, 1
        %v1115 = vsel %vm233, %v1114, %v1113
        %1117 = vmatprep.subr.mxu0 0.0
        %1118 = vmatpush1.msra.mxu0 %v1115
        %1119 = vmatprep.subr.mxu0 0.0
        %1120 = vmatpush1.msra.mxu0 0.0
        %1121 = vmatprep.subr.mxu0 0.0
        %1122 = vmatpush1.msra.mxu0 0.0
        %1123 = vmatprep.subr.mxu0 0.0
        %1124 = vmatpush1.msra.mxu0 0.0
        %1125 = vmatprep.subr.mxu0 0.0
        %1126 = vmatpush1.msra.mxu0 0.0
        %1127 = vmatprep.subr.mxu0 0.0
        %1128 = vmatpush1.msra.mxu0 0.0
        %1129 = vmatprep.subr.mxu0 0.0
        %1130 = vmatpush1.msra.mxu0 0.0
        %1131 = vmatprep.subr.mxu0 0.0
        %1132 = vmatpush1.msra.mxu0 0.0
        %1133 = vmatprep.subr.mxu0 0.0
        %1134 = vmatpush1.msra.mxu0 0.0
        %1135 = vmatprep.subr.mxu0 0.0
        %1136 = vmatpush1.msra.mxu0 0.0
        %1137 = vmatprep.subr.mxu0 0.0
        %1138 = vmatpush1.msra.mxu0 0.0
        %1139 = vmatprep.subr.mxu0 0.0
        %1140 = vmatpush1.msra.mxu0 0.0
        %1141 = vmatprep.subr.mxu0 0.0
        %1142 = vmatpush1.msra.mxu0 0.0
        %1143 = vmatprep.subr.mxu0 0.0
        %1144 = vmatpush1.msra.mxu0 0.0
        %1145 = vmatprep.subr.mxu0 0.0
        %1146 = vmatpush1.msra.mxu0 0.0
        %1147 = vmatprep.subr.mxu0 0.0
        %1148 = vmatpush1.msra.mxu0 0.0
        %1149 = vmatprep.subr.mxu0 0.0
        %1150 = vmatpush1.msra.mxu0 0.0
        %1151 = vmatprep.subr.mxu0 0.0
        %1152 = vmatpush1.msra.mxu0 0.0
        %1153 = vmatprep.subr.mxu0 0.0
        %1154 = vmatpush1.msra.mxu0 0.0
        %1155 = vmatprep.subr.mxu0 0.0
        %1156 = vmatpush1.msra.mxu0 0.0
        %1157 = vmatprep.subr.mxu0 0.0
        %1158 = vmatpush1.msra.mxu0 0.0
        %1159 = vmatprep.subr.mxu0 0.0
        %1160 = vmatpush1.msra.mxu0 0.0
        %1161 = vmatprep.subr.mxu0 0.0
        %1162 = vmatpush1.msra.mxu0 0.0
        %1163 = vmatprep.subr.mxu0 0.0
        %1164 = vmatpush1.msra.mxu0 0.0
        %1165 = vmatprep.subr.mxu0 0.0
        %1166 = vmatpush1.msra.mxu0 0.0
        %1167 = vmatprep.subr.mxu0 0.0
        %1168 = vmatpush1.msra.mxu0 0.0
        %1169 = vmatprep.subr.mxu0 0.0
        %1170 = vmatpush1.msra.mxu0 0.0
        %1171 = vmatprep.subr.mxu0 0.0
        %1172 = vmatpush1.msra.mxu0 0.0
        %1173 = vmatprep.subr.mxu0 0.0
        %1174 = vmatpush1.msra.mxu0 0.0
        %1175 = vmatprep.subr.mxu0 0.0
        %1176 = vmatpush1.msra.mxu0 0.0
        %1177 = vmatprep.subr.mxu0 0.0
        %1178 = vmatpush1.msra.mxu0 0.0
        %1179 = vmatprep.subr.mxu0 0.0
        %1180 = vmatpush1.msra.mxu0 0.0
        %1181 = vmatprep.mubr.f32.mxu0 0.0
        %1182 = vmatmul.mubr.f32.gmra.mrb[0].mxu0 %v238
        %v1183 = vpop.f32.mrb[0].mxu0
        %v1184 = vadd.f32 %v204, %v1183
        %v1185 = vpop.f32.mrb[0].mxu0
        %1186 = vdwg.mxu0
        %v1187 = vadd.f32 %v1184, 3.0
        %v1188 = vmax.f32 %v1187, 0.0
        %v1189 = vmin.f32 %v1188, 6.0
        %v1190 = vmul.f32 %v1189, 0.16666667
        %v1192 = vcombine.high %v1190, %v1190
        %v1194 = vunpack.c.l.s4 1966171168
        %v1195 = vunpack.c.0.s8 %v1194
        %v1196 = vlaneseq
        %v1197 = vshrl.u32 %v1196, 7
        %v1198 = vsub.s32 %v1195, %v1197
        %v1199 = vrot.slane %v1190, %v1198
        %v1201 = vunpack.c.l.s4 1966171168
        %v1202 = vunpack.c.0.s8 %v1201
        %v1203 = vlaneseq
        %v1204 = vshrl.u32 %v1203, 7
        %v1205 = vsub.s32 %v1202, %v1204
        %v1206 = vrot.slane %v1192, %v1205
        %v1207 = vcombine.high %v1199, %v1199
        %v1208 = vcombine.high %v1206, %v1206
        %v1210 = vunpack.c.l.s4 1966171168
        %v1211 = vunpack.c.0.s8 %v1210
        %v1212 = vlaneseq
        %v1213 = vshrl.u32 %v1212, 7
        %v1214 = vsub.s32 %v1211, %v1213
        %v1215 = vrot.slane %v1199, %v1214
        %v1217 = vunpack.c.l.s4 1966171168
        %v1218 = vunpack.c.0.s8 %v1217
        %v1219 = vlaneseq
        %v1220 = vshrl.u32 %v1219, 7
        %v1221 = vsub.s32 %v1218, %v1220
        %v1222 = vrot.slane %v1206, %v1221
        %v1224 = vunpack.c.l.s4 1966171168
        %v1225 = vunpack.c.0.s8 %v1224
        %v1226 = vlaneseq
        %v1227 = vshrl.u32 %v1226, 7
        %v1228 = vsub.s32 %v1225, %v1227
        %v1229 = vrot.slane %v1207, %v1228
        %v1231 = vunpack.c.l.s4 1966171168
        %v1232 = vunpack.c.0.s8 %v1231
        %v1233 = vlaneseq
        %v1234 = vshrl.u32 %v1233, 7
        %v1235 = vsub.s32 %v1232, %v1234
        %v1236 = vrot.slane %v1208, %v1235
        %v1237 = vcombine.high %v1215, %v1215
        %v1238 = vcombine.high %v1222, %v1222
        %v1239 = vcombine.high %v1229, %v1229
        %v1240 = vcombine.high %v1236, %v1236
        %v1241 = vlaneseq
        %v1242 = vshrl.u32 %v1241, 7
        %v1243 = vsub.s32 0, %v1242
        %v1244 = vrot.slane %v1215, %v1243
        %v1245 = vlaneseq
        %v1246 = vshrl.u32 %v1245, 7
        %v1247 = vsub.s32 0, %v1246
        %v1248 = vrot.slane %v1229, %v1247
        %v1249 = vlaneseq
        %v1250 = vshrl.u32 %v1249, 7
        %v1251 = vsub.s32 0, %v1250
        %v1252 = vrot.slane %v1237, %v1251
        %v1253 = vlaneseq
        %v1254 = vshrl.u32 %v1253, 7
        %v1255 = vsub.s32 0, %v1254
        %v1256 = vrot.slane %v1239, %v1255
        %v1257 = vlaneseq
        %v1258 = vshrl.u32 %v1257, 7
        %v1259 = vsub.s32 0, %v1258
        %v1260 = vrot.slane %v1222, %v1259
        %v1261 = vlaneseq
        %v1262 = vshrl.u32 %v1261, 7
        %v1263 = vsub.s32 0, %v1262
        %v1264 = vrot.slane %v1236, %v1263
        %v1265 = vlaneseq
        %v1266 = vshrl.u32 %v1265, 7
        %v1267 = vsub.s32 0, %v1266
        %v1268 = vrot.slane %v1238, %v1267
        %v1269 = vlaneseq
        %v1270 = vshrl.u32 %v1269, 7
        %v1271 = vsub.s32 0, %v1270
        %v1272 = vrot.slane %v1240, %v1271
        %1273 = vrot.lane.b32.xlu0 %v1244, 126
        %v1274 = vpop.permute.xlu0 %1273
        %1275 = vrot.lane.b32.xlu0 %v1248, 126
        %v1276 = vpop.permute.xlu0 %1275
        %1277 = vrot.lane.b32.xlu0 %v1252, 126
        %v1278 = vpop.permute.xlu0 %1277
        %1279 = vrot.lane.b32.xlu0 %v1256, 126
        %v1280 = vpop.permute.xlu0 %1279
        %1281 = vrot.lane.b32.xlu0 %v1260, 126
        %v1282 = vpop.permute.xlu0 %1281
        %1283 = vrot.lane.b32.xlu0 %v1264, 126
        %v1284 = vpop.permute.xlu0 %1283
        %1285 = vrot.lane.b32.xlu0 %v1268, 126
        %v1286 = vpop.permute.xlu0 %1285
        %1287 = vrot.lane.b32.xlu0 %v1272, 126
        %v1288 = vpop.permute.xlu0 %1287
        %1297 = vst.msk [vmem:[%s190 + $0x4] sm:$0x1] %vm420, %v1274
        %1298 = vst.msk [vmem:[%s190 + $0x14] sm:$0x1] %vm420, %v1276
        %1299 = vst.msk [vmem:[%s190 + $0x24] sm:$0x1] %vm420, %v1278
        %1300 = vst.msk [vmem:[%s190 + $0x34] sm:$0x1] %vm420, %v1280
        %1301 = vst.msk [vmem:[%s190 + $0x44] sm:$0x1] %vm420, %v1282
        %1302 = vst.msk [vmem:[%s190 + $0x54] sm:$0x1] %vm420, %v1284
        %1303 = vst.msk [vmem:[%s190 + $0x64] sm:$0x1] %vm420, %v1286
        %1304 = vst.msk [vmem:[%s190 + $0x74] sm:$0x1] %vm420, %v1288
        %v1305 = vld [vmem:[%s163 + $0x7] sm:$0x1]
        %v1306 = vld [vmem:[%s163 + $0x17] sm:$0x1]
        %v1307 = vld [vmem:[%s163 + $0x27] sm:$0x1]
        %v1308 = vld [vmem:[%s163 + $0x37] sm:$0x1]
        %v1309 = vld [vmem:[%s163 + $0x47] sm:$0x1]
        %v1310 = vld [vmem:[%s163 + $0x57] sm:$0x1]
        %v1311 = vld [vmem:[%s163 + $0x67] sm:$0x1]
        %v1312 = vld [vmem:[%s163 + $0x77] sm:$0x1]
        %v1321 = vrot.slane %v1306, 7
        %v1322 = vsel %vm215, %v1321, %v1305
        %v1323 = vrot.slane %v1307, 6
        %v1324 = vsel %vm218, %v1323, %v1322
        %v1325 = vrot.slane %v1308, 5
        %v1326 = vsel %vm221, %v1325, %v1324
        %v1327 = vrot.slane %v1309, 4
        %v1328 = vsel %vm224, %v1327, %v1326
        %v1329 = vrot.slane %v1310, 3
        %v1330 = vsel %vm227, %v1329, %v1328
        %v1331 = vrot.slane %v1311, 2
        %v1332 = vsel %vm230, %v1331, %v1330
        %v1333 = vrot.slane %v1312, 1
        %v1334 = vsel %vm233, %v1333, %v1332
        %1336 = vmatprep.subr.mxu0 0.0
        %1337 = vmatpush1.msra.mxu0 %v1334
        %1338 = vmatprep.subr.mxu0 0.0
        %1339 = vmatpush1.msra.mxu0 0.0
        %1340 = vmatprep.subr.mxu0 0.0
        %1341 = vmatpush1.msra.mxu0 0.0
        %1342 = vmatprep.subr.mxu0 0.0
        %1343 = vmatpush1.msra.mxu0 0.0
        %1344 = vmatprep.subr.mxu0 0.0
        %1345 = vmatpush1.msra.mxu0 0.0
        %1346 = vmatprep.subr.mxu0 0.0
        %1347 = vmatpush1.msra.mxu0 0.0
        %1348 = vmatprep.subr.mxu0 0.0
        %1349 = vmatpush1.msra.mxu0 0.0
        %1350 = vmatprep.subr.mxu0 0.0
        %1351 = vmatpush1.msra.mxu0 0.0
        %1352 = vmatprep.subr.mxu0 0.0
        %1353 = vmatpush1.msra.mxu0 0.0
        %1354 = vmatprep.subr.mxu0 0.0
        %1355 = vmatpush1.msra.mxu0 0.0
        %1356 = vmatprep.subr.mxu0 0.0
        %1357 = vmatpush1.msra.mxu0 0.0
        %1358 = vmatprep.subr.mxu0 0.0
        %1359 = vmatpush1.msra.mxu0 0.0
        %1360 = vmatprep.subr.mxu0 0.0
        %1361 = vmatpush1.msra.mxu0 0.0
        %1362 = vmatprep.subr.mxu0 0.0
        %1363 = vmatpush1.msra.mxu0 0.0
        %1364 = vmatprep.subr.mxu0 0.0
        %1365 = vmatpush1.msra.mxu0 0.0
        %1366 = vmatprep.subr.mxu0 0.0
        %1367 = vmatpush1.msra.mxu0 0.0
        %1368 = vmatprep.subr.mxu0 0.0
        %1369 = vmatpush1.msra.mxu0 0.0
        %1370 = vmatprep.subr.mxu0 0.0
        %1371 = vmatpush1.msra.mxu0 0.0
        %1372 = vmatprep.subr.mxu0 0.0
        %1373 = vmatpush1.msra.mxu0 0.0
        %1374 = vmatprep.subr.mxu0 0.0
        %1375 = vmatpush1.msra.mxu0 0.0
        %1376 = vmatprep.subr.mxu0 0.0
        %1377 = vmatpush1.msra.mxu0 0.0
        %1378 = vmatprep.subr.mxu0 0.0
        %1379 = vmatpush1.msra.mxu0 0.0
        %1380 = vmatprep.subr.mxu0 0.0
        %1381 = vmatpush1.msra.mxu0 0.0
        %1382 = vmatprep.subr.mxu0 0.0
        %1383 = vmatpush1.msra.mxu0 0.0
        %1384 = vmatprep.subr.mxu0 0.0
        %1385 = vmatpush1.msra.mxu0 0.0
        %1386 = vmatprep.subr.mxu0 0.0
        %1387 = vmatpush1.msra.mxu0 0.0
        %1388 = vmatprep.subr.mxu0 0.0
        %1389 = vmatpush1.msra.mxu0 0.0
        %1390 = vmatprep.subr.mxu0 0.0
        %1391 = vmatpush1.msra.mxu0 0.0
        %1392 = vmatprep.subr.mxu0 0.0
        %1393 = vmatpush1.msra.mxu0 0.0
        %1394 = vmatprep.subr.mxu0 0.0
        %1395 = vmatpush1.msra.mxu0 0.0
        %1396 = vmatprep.subr.mxu0 0.0
        %1397 = vmatpush1.msra.mxu0 0.0
        %1398 = vmatprep.subr.mxu0 0.0
        %1399 = vmatpush1.msra.mxu0 0.0
        %1400 = vmatprep.mubr.f32.mxu0 0.0
        %1401 = vmatmul.mubr.f32.gmra.mrb[0].mxu0 %v238
        %v1402 = vpop.f32.mrb[0].mxu0
        %v1403 = vadd.f32 %v204, %v1402
        %v1404 = vpop.f32.mrb[0].mxu0
        %1405 = vdwg.mxu0
        %v1406 = vadd.f32 %v1403, 3.0
        %v1407 = vmax.f32 %v1406, 0.0
        %v1408 = vmin.f32 %v1407, 6.0
        %v1409 = vmul.f32 %v1408, 0.16666667
        %v1411 = vcombine.high %v1409, %v1409
        %v1413 = vunpack.c.l.s4 1966171168
        %v1414 = vunpack.c.0.s8 %v1413
        %v1415 = vlaneseq
        %v1416 = vshrl.u32 %v1415, 7
        %v1417 = vsub.s32 %v1414, %v1416
        %v1418 = vrot.slane %v1409, %v1417
        %v1420 = vunpack.c.l.s4 1966171168
        %v1421 = vunpack.c.0.s8 %v1420
        %v1422 = vlaneseq
        %v1423 = vshrl.u32 %v1422, 7
        %v1424 = vsub.s32 %v1421, %v1423
        %v1425 = vrot.slane %v1411, %v1424
        %v1426 = vcombine.high %v1418, %v1418
        %v1427 = vcombine.high %v1425, %v1425
        %v1429 = vunpack.c.l.s4 1966171168
        %v1430 = vunpack.c.0.s8 %v1429
        %v1431 = vlaneseq
        %v1432 = vshrl.u32 %v1431, 7
        %v1433 = vsub.s32 %v1430, %v1432
        %v1434 = vrot.slane %v1418, %v1433
        %v1436 = vunpack.c.l.s4 1966171168
        %v1437 = vunpack.c.0.s8 %v1436
        %v1438 = vlaneseq
        %v1439 = vshrl.u32 %v1438, 7
        %v1440 = vsub.s32 %v1437, %v1439
        %v1441 = vrot.slane %v1425, %v1440
        %v1443 = vunpack.c.l.s4 1966171168
        %v1444 = vunpack.c.0.s8 %v1443
        %v1445 = vlaneseq
        %v1446 = vshrl.u32 %v1445, 7
        %v1447 = vsub.s32 %v1444, %v1446
        %v1448 = vrot.slane %v1426, %v1447
        %v1450 = vunpack.c.l.s4 1966171168
        %v1451 = vunpack.c.0.s8 %v1450
        %v1452 = vlaneseq
        %v1453 = vshrl.u32 %v1452, 7
        %v1454 = vsub.s32 %v1451, %v1453
        %v1455 = vrot.slane %v1427, %v1454
        %v1456 = vcombine.high %v1434, %v1434
        %v1457 = vcombine.high %v1441, %v1441
        %v1458 = vcombine.high %v1448, %v1448
        %v1459 = vcombine.high %v1455, %v1455
        %v1460 = vlaneseq
        %v1461 = vshrl.u32 %v1460, 7
        %v1462 = vsub.s32 0, %v1461
        %v1463 = vrot.slane %v1434, %v1462
        %v1464 = vlaneseq
        %v1465 = vshrl.u32 %v1464, 7
        %v1466 = vsub.s32 0, %v1465
        %v1467 = vrot.slane %v1448, %v1466
        %v1468 = vlaneseq
        %v1469 = vshrl.u32 %v1468, 7
        %v1470 = vsub.s32 0, %v1469
        %v1471 = vrot.slane %v1456, %v1470
        %v1472 = vlaneseq
        %v1473 = vshrl.u32 %v1472, 7
        %v1474 = vsub.s32 0, %v1473
        %v1475 = vrot.slane %v1458, %v1474
        %v1476 = vlaneseq
        %v1477 = vshrl.u32 %v1476, 7
        %v1478 = vsub.s32 0, %v1477
        %v1479 = vrot.slane %v1441, %v1478
        %v1480 = vlaneseq
        %v1481 = vshrl.u32 %v1480, 7
        %v1482 = vsub.s32 0, %v1481
        %v1483 = vrot.slane %v1455, %v1482
        %v1484 = vlaneseq
        %v1485 = vshrl.u32 %v1484, 7
        %v1486 = vsub.s32 0, %v1485
        %v1487 = vrot.slane %v1457, %v1486
        %v1488 = vlaneseq
        %v1489 = vshrl.u32 %v1488, 7
        %v1490 = vsub.s32 0, %v1489
        %v1491 = vrot.slane %v1459, %v1490
        %1492 = vrot.lane.b32.xlu0 %v1463, 126
        %v1493 = vpop.permute.xlu0 %1492
        %1494 = vrot.lane.b32.xlu0 %v1467, 126
        %v1495 = vpop.permute.xlu0 %1494
        %1496 = vrot.lane.b32.xlu0 %v1471, 126
        %v1497 = vpop.permute.xlu0 %1496
        %1498 = vrot.lane.b32.xlu0 %v1475, 126
        %v1499 = vpop.permute.xlu0 %1498
        %1500 = vrot.lane.b32.xlu0 %v1479, 126
        %v1501 = vpop.permute.xlu0 %1500
        %1502 = vrot.lane.b32.xlu0 %v1483, 126
        %v1503 = vpop.permute.xlu0 %1502
        %1504 = vrot.lane.b32.xlu0 %v1487, 126
        %v1505 = vpop.permute.xlu0 %1504
        %1506 = vrot.lane.b32.xlu0 %v1491, 126
        %v1507 = vpop.permute.xlu0 %1506
        %1516 = vst.msk [vmem:[%s190 + $0x5] sm:$0x1] %vm420, %v1493
        %1517 = vst.msk [vmem:[%s190 + $0x15] sm:$0x1] %vm420, %v1495
        %1518 = vst.msk [vmem:[%s190 + $0x25] sm:$0x1] %vm420, %v1497
        %1519 = vst.msk [vmem:[%s190 + $0x35] sm:$0x1] %vm420, %v1499
        %1520 = vst.msk [vmem:[%s190 + $0x45] sm:$0x1] %vm420, %v1501
        %1521 = vst.msk [vmem:[%s190 + $0x55] sm:$0x1] %vm420, %v1503
        %1522 = vst.msk [vmem:[%s190 + $0x65] sm:$0x1] %vm420, %v1505
        %1523 = vst.msk [vmem:[%s190 + $0x75] sm:$0x1] %vm420, %v1507
        %v1524 = vld [vmem:[%s163 + $0x8] sm:$0x1]
        %v1525 = vld [vmem:[%s163 + $0x18] sm:$0x1]
        %v1526 = vld [vmem:[%s163 + $0x28] sm:$0x1]
        %v1527 = vld [vmem:[%s163 + $0x38] sm:$0x1]
        %v1528 = vld [vmem:[%s163 + $0x48] sm:$0x1]
        %v1529 = vld [vmem:[%s163 + $0x58] sm:$0x1]
        %v1530 = vld [vmem:[%s163 + $0x68] sm:$0x1]
        %v1531 = vld [vmem:[%s163 + $0x78] sm:$0x1]
        %v1540 = vrot.slane %v1525, 7
        %v1541 = vsel %vm215, %v1540, %v1524
        %v1542 = vrot.slane %v1526, 6
        %v1543 = vsel %vm218, %v1542, %v1541
        %v1544 = vrot.slane %v1527, 5
        %v1545 = vsel %vm221, %v1544, %v1543
        %v1546 = vrot.slane %v1528, 4
        %v1547 = vsel %vm224, %v1546, %v1545
        %v1548 = vrot.slane %v1529, 3
        %v1549 = vsel %vm227, %v1548, %v1547
        %v1550 = vrot.slane %v1530, 2
        %v1551 = vsel %vm230, %v1550, %v1549
        %v1552 = vrot.slane %v1531, 1
        %v1553 = vsel %vm233, %v1552, %v1551
        %1555 = vmatprep.subr.mxu0 0.0
        %1556 = vmatpush1.msra.mxu0 %v1553
        %1557 = vmatprep.subr.mxu0 0.0
        %1558 = vmatpush1.msra.mxu0 0.0
        %1559 = vmatprep.subr.mxu0 0.0
        %1560 = vmatpush1.msra.mxu0 0.0
        %1561 = vmatprep.subr.mxu0 0.0
        %1562 = vmatpush1.msra.mxu0 0.0
        %1563 = vmatprep.subr.mxu0 0.0
        %1564 = vmatpush1.msra.mxu0 0.0
        %1565 = vmatprep.subr.mxu0 0.0
        %1566 = vmatpush1.msra.mxu0 0.0
        %1567 = vmatprep.subr.mxu0 0.0
        %1568 = vmatpush1.msra.mxu0 0.0
        %1569 = vmatprep.subr.mxu0 0.0
        %1570 = vmatpush1.msra.mxu0 0.0
        %1571 = vmatprep.subr.mxu0 0.0
        %1572 = vmatpush1.msra.mxu0 0.0
        %1573 = vmatprep.subr.mxu0 0.0
        %1574 = vmatpush1.msra.mxu0 0.0
        %1575 = vmatprep.subr.mxu0 0.0
        %1576 = vmatpush1.msra.mxu0 0.0
        %1577 = vmatprep.subr.mxu0 0.0
        %1578 = vmatpush1.msra.mxu0 0.0
        %1579 = vmatprep.subr.mxu0 0.0
        %1580 = vmatpush1.msra.mxu0 0.0
        %1581 = vmatprep.subr.mxu0 0.0
        %1582 = vmatpush1.msra.mxu0 0.0
        %1583 = vmatprep.subr.mxu0 0.0
        %1584 = vmatpush1.msra.mxu0 0.0
        %1585 = vmatprep.subr.mxu0 0.0
        %1586 = vmatpush1.msra.mxu0 0.0
        %1587 = vmatprep.subr.mxu0 0.0
        %1588 = vmatpush1.msra.mxu0 0.0
        %1589 = vmatprep.subr.mxu0 0.0
        %1590 = vmatpush1.msra.mxu0 0.0
        %1591 = vmatprep.subr.mxu0 0.0
        %1592 = vmatpush1.msra.mxu0 0.0
        %1593 = vmatprep.subr.mxu0 0.0
        %1594 = vmatpush1.msra.mxu0 0.0
        %1595 = vmatprep.subr.mxu0 0.0
        %1596 = vmatpush1.msra.mxu0 0.0
        %1597 = vmatprep.subr.mxu0 0.0
        %1598 = vmatpush1.msra.mxu0 0.0
        %1599 = vmatprep.subr.mxu0 0.0
        %1600 = vmatpush1.msra.mxu0 0.0
        %1601 = vmatprep.subr.mxu0 0.0
        %1602 = vmatpush1.msra.mxu0 0.0
        %1603 = vmatprep.subr.mxu0 0.0
        %1604 = vmatpush1.msra.mxu0 0.0
        %1605 = vmatprep.subr.mxu0 0.0
        %1606 = vmatpush1.msra.mxu0 0.0
        %1607 = vmatprep.subr.mxu0 0.0
        %1608 = vmatpush1.msra.mxu0 0.0
        %1609 = vmatprep.subr.mxu0 0.0
        %1610 = vmatpush1.msra.mxu0 0.0
        %1611 = vmatprep.subr.mxu0 0.0
        %1612 = vmatpush1.msra.mxu0 0.0
        %1613 = vmatprep.subr.mxu0 0.0
        %1614 = vmatpush1.msra.mxu0 0.0
        %1615 = vmatprep.subr.mxu0 0.0
        %1616 = vmatpush1.msra.mxu0 0.0
        %1617 = vmatprep.subr.mxu0 0.0
        %1618 = vmatpush1.msra.mxu0 0.0
        %1619 = vmatprep.mubr.f32.mxu0 0.0
        %1620 = vmatmul.mubr.f32.gmra.mrb[0].mxu0 %v238
        %v1621 = vpop.f32.mrb[0].mxu0
        %v1622 = vadd.f32 %v204, %v1621
        %v1623 = vpop.f32.mrb[0].mxu0
        %1624 = vdwg.mxu0
        %v1625 = vadd.f32 %v1622, 3.0
        %v1626 = vmax.f32 %v1625, 0.0
        %v1627 = vmin.f32 %v1626, 6.0
        %v1628 = vmul.f32 %v1627, 0.16666667
        %v1630 = vcombine.high %v1628, %v1628
        %v1632 = vunpack.c.l.s4 1966171168
        %v1633 = vunpack.c.0.s8 %v1632
        %v1634 = vlaneseq
        %v1635 = vshrl.u32 %v1634, 7
        %v1636 = vsub.s32 %v1633, %v1635
        %v1637 = vrot.slane %v1628, %v1636
        %v1639 = vunpack.c.l.s4 1966171168
        %v1640 = vunpack.c.0.s8 %v1639
        %v1641 = vlaneseq
        %v1642 = vshrl.u32 %v1641, 7
        %v1643 = vsub.s32 %v1640, %v1642
        %v1644 = vrot.slane %v1630, %v1643
        %v1645 = vcombine.high %v1637, %v1637
        %v1646 = vcombine.high %v1644, %v1644
        %v1648 = vunpack.c.l.s4 1966171168
        %v1649 = vunpack.c.0.s8 %v1648
        %v1650 = vlaneseq
        %v1651 = vshrl.u32 %v1650, 7
        %v1652 = vsub.s32 %v1649, %v1651
        %v1653 = vrot.slane %v1637, %v1652
        %v1655 = vunpack.c.l.s4 1966171168
        %v1656 = vunpack.c.0.s8 %v1655
        %v1657 = vlaneseq
        %v1658 = vshrl.u32 %v1657, 7
        %v1659 = vsub.s32 %v1656, %v1658
        %v1660 = vrot.slane %v1644, %v1659
        %v1662 = vunpack.c.l.s4 1966171168
        %v1663 = vunpack.c.0.s8 %v1662
        %v1664 = vlaneseq
        %v1665 = vshrl.u32 %v1664, 7
        %v1666 = vsub.s32 %v1663, %v1665
        %v1667 = vrot.slane %v1645, %v1666
        %v1669 = vunpack.c.l.s4 1966171168
        %v1670 = vunpack.c.0.s8 %v1669
        %v1671 = vlaneseq
        %v1672 = vshrl.u32 %v1671, 7
        %v1673 = vsub.s32 %v1670, %v1672
        %v1674 = vrot.slane %v1646, %v1673
        %v1675 = vcombine.high %v1653, %v1653
        %v1676 = vcombine.high %v1660, %v1660
        %v1677 = vcombine.high %v1667, %v1667
        %v1678 = vcombine.high %v1674, %v1674
        %v1679 = vlaneseq
        %v1680 = vshrl.u32 %v1679, 7
        %v1681 = vsub.s32 0, %v1680
        %v1682 = vrot.slane %v1653, %v1681
        %v1683 = vlaneseq
        %v1684 = vshrl.u32 %v1683, 7
        %v1685 = vsub.s32 0, %v1684
        %v1686 = vrot.slane %v1667, %v1685
        %v1687 = vlaneseq
        %v1688 = vshrl.u32 %v1687, 7
        %v1689 = vsub.s32 0, %v1688
        %v1690 = vrot.slane %v1675, %v1689
        %v1691 = vlaneseq
        %v1692 = vshrl.u32 %v1691, 7
        %v1693 = vsub.s32 0, %v1692
        %v1694 = vrot.slane %v1677, %v1693
        %v1695 = vlaneseq
        %v1696 = vshrl.u32 %v1695, 7
        %v1697 = vsub.s32 0, %v1696
        %v1698 = vrot.slane %v1660, %v1697
        %v1699 = vlaneseq
        %v1700 = vshrl.u32 %v1699, 7
        %v1701 = vsub.s32 0, %v1700
        %v1702 = vrot.slane %v1674, %v1701
        %v1703 = vlaneseq
        %v1704 = vshrl.u32 %v1703, 7
        %v1705 = vsub.s32 0, %v1704
        %v1706 = vrot.slane %v1676, %v1705
        %v1707 = vlaneseq
        %v1708 = vshrl.u32 %v1707, 7
        %v1709 = vsub.s32 0, %v1708
        %v1710 = vrot.slane %v1678, %v1709
        %1711 = vrot.lane.b32.xlu0 %v1682, 126
        %v1712 = vpop.permute.xlu0 %1711
        %1713 = vrot.lane.b32.xlu0 %v1686, 126
        %v1714 = vpop.permute.xlu0 %1713
        %1715 = vrot.lane.b32.xlu0 %v1690, 126
        %v1716 = vpop.permute.xlu0 %1715
        %1717 = vrot.lane.b32.xlu0 %v1694, 126
        %v1718 = vpop.permute.xlu0 %1717
        %1719 = vrot.lane.b32.xlu0 %v1698, 126
        %v1720 = vpop.permute.xlu0 %1719
        %1721 = vrot.lane.b32.xlu0 %v1702, 126
        %v1722 = vpop.permute.xlu0 %1721
        %1723 = vrot.lane.b32.xlu0 %v1706, 126
        %v1724 = vpop.permute.xlu0 %1723
        %1725 = vrot.lane.b32.xlu0 %v1710, 126
        %v1726 = vpop.permute.xlu0 %1725
        %1735 = vst.msk [vmem:[%s190 + $0x6] sm:$0x1] %vm420, %v1712
        %1736 = vst.msk [vmem:[%s190 + $0x16] sm:$0x1] %vm420, %v1714
        %1737 = vst.msk [vmem:[%s190 + $0x26] sm:$0x1] %vm420, %v1716
        %1738 = vst.msk [vmem:[%s190 + $0x36] sm:$0x1] %vm420, %v1718
        %1739 = vst.msk [vmem:[%s190 + $0x46] sm:$0x1] %vm420, %v1720
        %1740 = vst.msk [vmem:[%s190 + $0x56] sm:$0x1] %vm420, %v1722
        %1741 = vst.msk [vmem:[%s190 + $0x66] sm:$0x1] %vm420, %v1724
        %1742 = vst.msk [vmem:[%s190 + $0x76] sm:$0x1] %vm420, %v1726
        %v1743 = vld [vmem:[%s163 + $0x9] sm:$0x1]
        %v1744 = vld [vmem:[%s163 + $0x19] sm:$0x1]
        %v1745 = vld [vmem:[%s163 + $0x29] sm:$0x1]
        %v1746 = vld [vmem:[%s163 + $0x39] sm:$0x1]
        %v1747 = vld [vmem:[%s163 + $0x49] sm:$0x1]
        %v1748 = vld [vmem:[%s163 + $0x59] sm:$0x1]
        %v1749 = vld [vmem:[%s163 + $0x69] sm:$0x1]
        %v1750 = vld [vmem:[%s163 + $0x79] sm:$0x1]
        %v1759 = vrot.slane %v1744, 7
        %v1760 = vsel %vm215, %v1759, %v1743
        %v1761 = vrot.slane %v1745, 6
        %v1762 = vsel %vm218, %v1761, %v1760
        %v1763 = vrot.slane %v1746, 5
        %v1764 = vsel %vm221, %v1763, %v1762
        %v1765 = vrot.slane %v1747, 4
        %v1766 = vsel %vm224, %v1765, %v1764
        %v1767 = vrot.slane %v1748, 3
        %v1768 = vsel %vm227, %v1767, %v1766
        %v1769 = vrot.slane %v1749, 2
        %v1770 = vsel %vm230, %v1769, %v1768
        %v1771 = vrot.slane %v1750, 1
        %v1772 = vsel %vm233, %v1771, %v1770
        %1774 = vmatprep.subr.mxu0 0.0
        %1775 = vmatpush1.msra.mxu0 %v1772
        %1776 = vmatprep.subr.mxu0 0.0
        %1777 = vmatpush1.msra.mxu0 0.0
        %1778 = vmatprep.subr.mxu0 0.0
        %1779 = vmatpush1.msra.mxu0 0.0
        %1780 = vmatprep.subr.mxu0 0.0
        %1781 = vmatpush1.msra.mxu0 0.0
        %1782 = vmatprep.subr.mxu0 0.0
        %1783 = vmatpush1.msra.mxu0 0.0
        %1784 = vmatprep.subr.mxu0 0.0
        %1785 = vmatpush1.msra.mxu0 0.0
        %1786 = vmatprep.subr.mxu0 0.0
        %1787 = vmatpush1.msra.mxu0 0.0
        %1788 = vmatprep.subr.mxu0 0.0
        %1789 = vmatpush1.msra.mxu0 0.0
        %1790 = vmatprep.subr.mxu0 0.0
        %1791 = vmatpush1.msra.mxu0 0.0
        %1792 = vmatprep.subr.mxu0 0.0
        %1793 = vmatpush1.msra.mxu0 0.0
        %1794 = vmatprep.subr.mxu0 0.0
        %1795 = vmatpush1.msra.mxu0 0.0
        %1796 = vmatprep.subr.mxu0 0.0
        %1797 = vmatpush1.msra.mxu0 0.0
        %1798 = vmatprep.subr.mxu0 0.0
        %1799 = vmatpush1.msra.mxu0 0.0
        %1800 = vmatprep.subr.mxu0 0.0
        %1801 = vmatpush1.msra.mxu0 0.0
        %1802 = vmatprep.subr.mxu0 0.0
        %1803 = vmatpush1.msra.mxu0 0.0
        %1804 = vmatprep.subr.mxu0 0.0
        %1805 = vmatpush1.msra.mxu0 0.0
        %1806 = vmatprep.subr.mxu0 0.0
        %1807 = vmatpush1.msra.mxu0 0.0
        %1808 = vmatprep.subr.mxu0 0.0
        %1809 = vmatpush1.msra.mxu0 0.0
        %1810 = vmatprep.subr.mxu0 0.0
        %1811 = vmatpush1.msra.mxu0 0.0
        %1812 = vmatprep.subr.mxu0 0.0
        %1813 = vmatpush1.msra.mxu0 0.0
        %1814 = vmatprep.subr.mxu0 0.0
        %1815 = vmatpush1.msra.mxu0 0.0
        %1816 = vmatprep.subr.mxu0 0.0
        %1817 = vmatpush1.msra.mxu0 0.0
        %1818 = vmatprep.subr.mxu0 0.0
        %1819 = vmatpush1.msra.mxu0 0.0
        %1820 = vmatprep.subr.mxu0 0.0
        %1821 = vmatpush1.msra.mxu0 0.0
        %1822 = vmatprep.subr.mxu0 0.0
        %1823 = vmatpush1.msra.mxu0 0.0
        %1824 = vmatprep.subr.mxu0 0.0
        %1825 = vmatpush1.msra.mxu0 0.0
        %1826 = vmatprep.subr.mxu0 0.0
        %1827 = vmatpush1.msra.mxu0 0.0
        %1828 = vmatprep.subr.mxu0 0.0
        %1829 = vmatpush1.msra.mxu0 0.0
        %1830 = vmatprep.subr.mxu0 0.0
        %1831 = vmatpush1.msra.mxu0 0.0
        %1832 = vmatprep.subr.mxu0 0.0
        %1833 = vmatpush1.msra.mxu0 0.0
        %1834 = vmatprep.subr.mxu0 0.0
        %1835 = vmatpush1.msra.mxu0 0.0
        %1836 = vmatprep.subr.mxu0 0.0
        %1837 = vmatpush1.msra.mxu0 0.0
        %1838 = vmatprep.mubr.f32.mxu0 0.0
        %1839 = vmatmul.mubr.f32.gmra.mrb[0].mxu0 %v238
        %v1840 = vpop.f32.mrb[0].mxu0
        %v1841 = vadd.f32 %v204, %v1840
        %v1842 = vpop.f32.mrb[0].mxu0
        %1843 = vdwg.mxu0
        %v1844 = vadd.f32 %v1841, 3.0
        %v1845 = vmax.f32 %v1844, 0.0
        %v1846 = vmin.f32 %v1845, 6.0
        %v1847 = vmul.f32 %v1846, 0.16666667
        %v1849 = vcombine.high %v1847, %v1847
        %v1851 = vunpack.c.l.s4 1966171168
        %v1852 = vunpack.c.0.s8 %v1851
        %v1853 = vlaneseq
        %v1854 = vshrl.u32 %v1853, 7
        %v1855 = vsub.s32 %v1852, %v1854
        %v1856 = vrot.slane %v1847, %v1855
        %v1858 = vunpack.c.l.s4 1966171168
        %v1859 = vunpack.c.0.s8 %v1858
        %v1860 = vlaneseq
        %v1861 = vshrl.u32 %v1860, 7
        %v1862 = vsub.s32 %v1859, %v1861
        %v1863 = vrot.slane %v1849, %v1862
        %v1864 = vcombine.high %v1856, %v1856
        %v1865 = vcombine.high %v1863, %v1863
        %v1867 = vunpack.c.l.s4 1966171168
        %v1868 = vunpack.c.0.s8 %v1867
        %v1869 = vlaneseq
        %v1870 = vshrl.u32 %v1869, 7
        %v1871 = vsub.s32 %v1868, %v1870
        %v1872 = vrot.slane %v1856, %v1871
        %v1874 = vunpack.c.l.s4 1966171168
        %v1875 = vunpack.c.0.s8 %v1874
        %v1876 = vlaneseq
        %v1877 = vshrl.u32 %v1876, 7
        %v1878 = vsub.s32 %v1875, %v1877
        %v1879 = vrot.slane %v1863, %v1878
        %v1881 = vunpack.c.l.s4 1966171168
        %v1882 = vunpack.c.0.s8 %v1881
        %v1883 = vlaneseq
        %v1884 = vshrl.u32 %v1883, 7
        %v1885 = vsub.s32 %v1882, %v1884
        %v1886 = vrot.slane %v1864, %v1885
        %v1888 = vunpack.c.l.s4 1966171168
        %v1889 = vunpack.c.0.s8 %v1888
        %v1890 = vlaneseq
        %v1891 = vshrl.u32 %v1890, 7
        %v1892 = vsub.s32 %v1889, %v1891
        %v1893 = vrot.slane %v1865, %v1892
        %v1894 = vcombine.high %v1872, %v1872
        %v1895 = vcombine.high %v1879, %v1879
        %v1896 = vcombine.high %v1886, %v1886
        %v1897 = vcombine.high %v1893, %v1893
        %v1898 = vlaneseq
        %v1899 = vshrl.u32 %v1898, 7
        %v1900 = vsub.s32 0, %v1899
        %v1901 = vrot.slane %v1872, %v1900
        %v1902 = vlaneseq
        %v1903 = vshrl.u32 %v1902, 7
        %v1904 = vsub.s32 0, %v1903
        %v1905 = vrot.slane %v1886, %v1904
        %v1906 = vlaneseq
        %v1907 = vshrl.u32 %v1906, 7
        %v1908 = vsub.s32 0, %v1907
        %v1909 = vrot.slane %v1894, %v1908
        %v1910 = vlaneseq
        %v1911 = vshrl.u32 %v1910, 7
        %v1912 = vsub.s32 0, %v1911
        %v1913 = vrot.slane %v1896, %v1912
        %v1914 = vlaneseq
        %v1915 = vshrl.u32 %v1914, 7
        %v1916 = vsub.s32 0, %v1915
        %v1917 = vrot.slane %v1879, %v1916
        %v1918 = vlaneseq
        %v1919 = vshrl.u32 %v1918, 7
        %v1920 = vsub.s32 0, %v1919
        %v1921 = vrot.slane %v1893, %v1920
        %v1922 = vlaneseq
        %v1923 = vshrl.u32 %v1922, 7
        %v1924 = vsub.s32 0, %v1923
        %v1925 = vrot.slane %v1895, %v1924
        %v1926 = vlaneseq
        %v1927 = vshrl.u32 %v1926, 7
        %v1928 = vsub.s32 0, %v1927
        %v1929 = vrot.slane %v1897, %v1928
        %1930 = vrot.lane.b32.xlu0 %v1901, 126
        %v1931 = vpop.permute.xlu0 %1930
        %1932 = vrot.lane.b32.xlu0 %v1905, 126
        %v1933 = vpop.permute.xlu0 %1932
        %1934 = vrot.lane.b32.xlu0 %v1909, 126
        %v1935 = vpop.permute.xlu0 %1934
        %1936 = vrot.lane.b32.xlu0 %v1913, 126
        %v1937 = vpop.permute.xlu0 %1936
        %1938 = vrot.lane.b32.xlu0 %v1917, 126
        %v1939 = vpop.permute.xlu0 %1938
        %1940 = vrot.lane.b32.xlu0 %v1921, 126
        %v1941 = vpop.permute.xlu0 %1940
        %1942 = vrot.lane.b32.xlu0 %v1925, 126
        %v1943 = vpop.permute.xlu0 %1942
        %1944 = vrot.lane.b32.xlu0 %v1929, 126
        %v1945 = vpop.permute.xlu0 %1944
        %1954 = vst.msk [vmem:[%s190 + $0x7] sm:$0x1] %vm420, %v1931
        %1955 = vst.msk [vmem:[%s190 + $0x17] sm:$0x1] %vm420, %v1933
        %1956 = vst.msk [vmem:[%s190 + $0x27] sm:$0x1] %vm420, %v1935
        %1957 = vst.msk [vmem:[%s190 + $0x37] sm:$0x1] %vm420, %v1937
        %1958 = vst.msk [vmem:[%s190 + $0x47] sm:$0x1] %vm420, %v1939
        %1959 = vst.msk [vmem:[%s190 + $0x57] sm:$0x1] %vm420, %v1941
        %1960 = vst.msk [vmem:[%s190 + $0x67] sm:$0x1] %vm420, %v1943
        %1961 = vst.msk [vmem:[%s190 + $0x77] sm:$0x1] %vm420, %v1945
        %v1962 = vld [vmem:[%s163 + $0xa] sm:$0x1]
        %v1963 = vld [vmem:[%s163 + $0x1a] sm:$0x1]
        %v1964 = vld [vmem:[%s163 + $0x2a] sm:$0x1]
        %v1965 = vld [vmem:[%s163 + $0x3a] sm:$0x1]
        %v1966 = vld [vmem:[%s163 + $0x4a] sm:$0x1]
        %v1967 = vld [vmem:[%s163 + $0x5a] sm:$0x1]
        %v1968 = vld [vmem:[%s163 + $0x6a] sm:$0x1]
        %v1969 = vld [vmem:[%s163 + $0x7a] sm:$0x1]
        %v1978 = vrot.slane %v1963, 7
        %v1979 = vsel %vm215, %v1978, %v1962
        %v1980 = vrot.slane %v1964, 6
        %v1981 = vsel %vm218, %v1980, %v1979
        %v1982 = vrot.slane %v1965, 5
        %v1983 = vsel %vm221, %v1982, %v1981
        %v1984 = vrot.slane %v1966, 4
        %v1985 = vsel %vm224, %v1984, %v1983
        %v1986 = vrot.slane %v1967, 3
        %v1987 = vsel %vm227, %v1986, %v1985
        %v1988 = vrot.slane %v1968, 2
        %v1989 = vsel %vm230, %v1988, %v1987
        %v1990 = vrot.slane %v1969, 1
        %v1991 = vsel %vm233, %v1990, %v1989
        %1993 = vmatprep.subr.mxu0 0.0
        %1994 = vmatpush1.msra.mxu0 %v1991
        %1995 = vmatprep.subr.mxu0 0.0
        %1996 = vmatpush1.msra.mxu0 0.0
        %1997 = vmatprep.subr.mxu0 0.0
        %1998 = vmatpush1.msra.mxu0 0.0
        %1999 = vmatprep.subr.mxu0 0.0
        %2000 = vmatpush1.msra.mxu0 0.0
        %2001 = vmatprep.subr.mxu0 0.0
        %2002 = vmatpush1.msra.mxu0 0.0
        %2003 = vmatprep.subr.mxu0 0.0
        %2004 = vmatpush1.msra.mxu0 0.0
        %2005 = vmatprep.subr.mxu0 0.0
        %2006 = vmatpush1.msra.mxu0 0.0
        %2007 = vmatprep.subr.mxu0 0.0
        %2008 = vmatpush1.msra.mxu0 0.0
        %2009 = vmatprep.subr.mxu0 0.0
        %2010 = vmatpush1.msra.mxu0 0.0
        %2011 = vmatprep.subr.mxu0 0.0
        %2012 = vmatpush1.msra.mxu0 0.0
        %2013 = vmatprep.subr.mxu0 0.0
        %2014 = vmatpush1.msra.mxu0 0.0
        %2015 = vmatprep.subr.mxu0 0.0
        %2016 = vmatpush1.msra.mxu0 0.0
        %2017 = vmatprep.subr.mxu0 0.0
        %2018 = vmatpush1.msra.mxu0 0.0
        %2019 = vmatprep.subr.mxu0 0.0
        %2020 = vmatpush1.msra.mxu0 0.0
        %2021 = vmatprep.subr.mxu0 0.0
        %2022 = vmatpush1.msra.mxu0 0.0
        %2023 = vmatprep.subr.mxu0 0.0
        %2024 = vmatpush1.msra.mxu0 0.0
        %2025 = vmatprep.subr.mxu0 0.0
        %2026 = vmatpush1.msra.mxu0 0.0
        %2027 = vmatprep.subr.mxu0 0.0
        %2028 = vmatpush1.msra.mxu0 0.0
        %2029 = vmatprep.subr.mxu0 0.0
        %2030 = vmatpush1.msra.mxu0 0.0
        %2031 = vmatprep.subr.mxu0 0.0
        %2032 = vmatpush1.msra.mxu0 0.0
        %2033 = vmatprep.subr.mxu0 0.0
        %2034 = vmatpush1.msra.mxu0 0.0
        %2035 = vmatprep.subr.mxu0 0.0
        %2036 = vmatpush1.msra.mxu0 0.0
        %2037 = vmatprep.subr.mxu0 0.0
        %2038 = vmatpush1.msra.mxu0 0.0
        %2039 = vmatprep.subr.mxu0 0.0
        %2040 = vmatpush1.msra.mxu0 0.0
        %2041 = vmatprep.subr.mxu0 0.0
        %2042 = vmatpush1.msra.mxu0 0.0
        %2043 = vmatprep.subr.mxu0 0.0
        %2044 = vmatpush1.msra.mxu0 0.0
        %2045 = vmatprep.subr.mxu0 0.0
        %2046 = vmatpush1.msra.mxu0 0.0
        %2047 = vmatprep.subr.mxu0 0.0
        %2048 = vmatpush1.msra.mxu0 0.0
        %2049 = vmatprep.subr.mxu0 0.0
        %2050 = vmatpush1.msra.mxu0 0.0
        %2051 = vmatprep.subr.mxu0 0.0
        %2052 = vmatpush1.msra.mxu0 0.0
        %2053 = vmatprep.subr.mxu0 0.0
        %2054 = vmatpush1.msra.mxu0 0.0
        %2055 = vmatprep.subr.mxu0 0.0
        %2056 = vmatpush1.msra.mxu0 0.0
        %2057 = vmatprep.mubr.f32.mxu0 0.0
        %2058 = vmatmul.mubr.f32.gmra.mrb[0].mxu0 %v238
        %v2059 = vpop.f32.mrb[0].mxu0
        %v2060 = vadd.f32 %v204, %v2059
        %v2061 = vpop.f32.mrb[0].mxu0
        %2062 = vdwg.mxu0
        %v2063 = vadd.f32 %v2060, 3.0
        %v2064 = vmax.f32 %v2063, 0.0
        %v2065 = vmin.f32 %v2064, 6.0
        %v2066 = vmul.f32 %v2065, 0.16666667
        %v2068 = vcombine.high %v2066, %v2066
        %v2070 = vunpack.c.l.s4 1966171168
        %v2071 = vunpack.c.0.s8 %v2070
        %v2072 = vlaneseq
        %v2073 = vshrl.u32 %v2072, 7
        %v2074 = vsub.s32 %v2071, %v2073
        %v2075 = vrot.slane %v2066, %v2074
        %v2077 = vunpack.c.l.s4 1966171168
        %v2078 = vunpack.c.0.s8 %v2077
        %v2079 = vlaneseq
        %v2080 = vshrl.u32 %v2079, 7
        %v2081 = vsub.s32 %v2078, %v2080
        %v2082 = vrot.slane %v2068, %v2081
        %v2083 = vcombine.high %v2075, %v2075
        %v2084 = vcombine.high %v2082, %v2082
        %v2086 = vunpack.c.l.s4 1966171168
        %v2087 = vunpack.c.0.s8 %v2086
        %v2088 = vlaneseq
        %v2089 = vshrl.u32 %v2088, 7
        %v2090 = vsub.s32 %v2087, %v2089
        %v2091 = vrot.slane %v2075, %v2090
        %v2093 = vunpack.c.l.s4 1966171168
        %v2094 = vunpack.c.0.s8 %v2093
        %v2095 = vlaneseq
        %v2096 = vshrl.u32 %v2095, 7
        %v2097 = vsub.s32 %v2094, %v2096
        %v2098 = vrot.slane %v2082, %v2097
        %v2100 = vunpack.c.l.s4 1966171168
        %v2101 = vunpack.c.0.s8 %v2100
        %v2102 = vlaneseq
        %v2103 = vshrl.u32 %v2102, 7
        %v2104 = vsub.s32 %v2101, %v2103
        %v2105 = vrot.slane %v2083, %v2104
        %v2107 = vunpack.c.l.s4 1966171168
        %v2108 = vunpack.c.0.s8 %v2107
        %v2109 = vlaneseq
        %v2110 = vshrl.u32 %v2109, 7
        %v2111 = vsub.s32 %v2108, %v2110
        %v2112 = vrot.slane %v2084, %v2111
        %v2113 = vcombine.high %v2091, %v2091
        %v2114 = vcombine.high %v2098, %v2098
        %v2115 = vcombine.high %v2105, %v2105
        %v2116 = vcombine.high %v2112, %v2112
        %v2117 = vlaneseq
        %v2118 = vshrl.u32 %v2117, 7
        %v2119 = vsub.s32 0, %v2118
        %v2120 = vrot.slane %v2091, %v2119
        %v2121 = vlaneseq
        %v2122 = vshrl.u32 %v2121, 7
        %v2123 = vsub.s32 0, %v2122
        %v2124 = vrot.slane %v2105, %v2123
        %v2125 = vlaneseq
        %v2126 = vshrl.u32 %v2125, 7
        %v2127 = vsub.s32 0, %v2126
        %v2128 = vrot.slane %v2113, %v2127
        %v2129 = vlaneseq
        %v2130 = vshrl.u32 %v2129, 7
        %v2131 = vsub.s32 0, %v2130
        %v2132 = vrot.slane %v2115, %v2131
        %v2133 = vlaneseq
        %v2134 = vshrl.u32 %v2133, 7
        %v2135 = vsub.s32 0, %v2134
        %v2136 = vrot.slane %v2098, %v2135
        %v2137 = vlaneseq
        %v2138 = vshrl.u32 %v2137, 7
        %v2139 = vsub.s32 0, %v2138
        %v2140 = vrot.slane %v2112, %v2139
        %v2141 = vlaneseq
        %v2142 = vshrl.u32 %v2141, 7
        %v2143 = vsub.s32 0, %v2142
        %v2144 = vrot.slane %v2114, %v2143
        %v2145 = vlaneseq
        %v2146 = vshrl.u32 %v2145, 7
        %v2147 = vsub.s32 0, %v2146
        %v2148 = vrot.slane %v2116, %v2147
        %2149 = vrot.lane.b32.xlu0 %v2120, 126
        %v2150 = vpop.permute.xlu0 %2149
        %2151 = vrot.lane.b32.xlu0 %v2124, 126
        %v2152 = vpop.permute.xlu0 %2151
        %2153 = vrot.lane.b32.xlu0 %v2128, 126
        %v2154 = vpop.permute.xlu0 %2153
        %2155 = vrot.lane.b32.xlu0 %v2132, 126
        %v2156 = vpop.permute.xlu0 %2155
        %2157 = vrot.lane.b32.xlu0 %v2136, 126
        %v2158 = vpop.permute.xlu0 %2157
        %2159 = vrot.lane.b32.xlu0 %v2140, 126
        %v2160 = vpop.permute.xlu0 %2159
        %2161 = vrot.lane.b32.xlu0 %v2144, 126
        %v2162 = vpop.permute.xlu0 %2161
        %2163 = vrot.lane.b32.xlu0 %v2148, 126
        %v2164 = vpop.permute.xlu0 %2163
        %2173 = vst.msk [vmem:[%s190 + $0x8] sm:$0x1] %vm420, %v2150
        %2174 = vst.msk [vmem:[%s190 + $0x18] sm:$0x1] %vm420, %v2152
        %2175 = vst.msk [vmem:[%s190 + $0x28] sm:$0x1] %vm420, %v2154
        %2176 = vst.msk [vmem:[%s190 + $0x38] sm:$0x1] %vm420, %v2156
        %2177 = vst.msk [vmem:[%s190 + $0x48] sm:$0x1] %vm420, %v2158
        %2178 = vst.msk [vmem:[%s190 + $0x58] sm:$0x1] %vm420, %v2160
        %2179 = vst.msk [vmem:[%s190 + $0x68] sm:$0x1] %vm420, %v2162
        %2180 = vst.msk [vmem:[%s190 + $0x78] sm:$0x1] %vm420, %v2164
        %v2181 = vld [vmem:[%s163 + $0xb] sm:$0x1]
        %v2182 = vld [vmem:[%s163 + $0x1b] sm:$0x1]
        %v2183 = vld [vmem:[%s163 + $0x2b] sm:$0x1]
        %v2184 = vld [vmem:[%s163 + $0x3b] sm:$0x1]
        %v2185 = vld [vmem:[%s163 + $0x4b] sm:$0x1]
        %v2186 = vld [vmem:[%s163 + $0x5b] sm:$0x1]
        %v2187 = vld [vmem:[%s163 + $0x6b] sm:$0x1]
        %v2188 = vld [vmem:[%s163 + $0x7b] sm:$0x1]
        %v2197 = vrot.slane %v2182, 7
        %v2198 = vsel %vm215, %v2197, %v2181
        %v2199 = vrot.slane %v2183, 6
        %v2200 = vsel %vm218, %v2199, %v2198
        %v2201 = vrot.slane %v2184, 5
        %v2202 = vsel %vm221, %v2201, %v2200
        %v2203 = vrot.slane %v2185, 4
        %v2204 = vsel %vm224, %v2203, %v2202
        %v2205 = vrot.slane %v2186, 3
        %v2206 = vsel %vm227, %v2205, %v2204
        %v2207 = vrot.slane %v2187, 2
        %v2208 = vsel %vm230, %v2207, %v2206
        %v2209 = vrot.slane %v2188, 1
        %v2210 = vsel %vm233, %v2209, %v2208
        %2212 = vmatprep.subr.mxu0 0.0
        %2213 = vmatpush1.msra.mxu0 %v2210
        %2214 = vmatprep.subr.mxu0 0.0
        %2215 = vmatpush1.msra.mxu0 0.0
        %2216 = vmatprep.subr.mxu0 0.0
        %2217 = vmatpush1.msra.mxu0 0.0
        %2218 = vmatprep.subr.mxu0 0.0
        %2219 = vmatpush1.msra.mxu0 0.0
        %2220 = vmatprep.subr.mxu0 0.0
        %2221 = vmatpush1.msra.mxu0 0.0
        %2222 = vmatprep.subr.mxu0 0.0
        %2223 = vmatpush1.msra.mxu0 0.0
        %2224 = vmatprep.subr.mxu0 0.0
        %2225 = vmatpush1.msra.mxu0 0.0
        %2226 = vmatprep.subr.mxu0 0.0
        %2227 = vmatpush1.msra.mxu0 0.0
        %2228 = vmatprep.subr.mxu0 0.0
        %2229 = vmatpush1.msra.mxu0 0.0
        %2230 = vmatprep.subr.mxu0 0.0
        %2231 = vmatpush1.msra.mxu0 0.0
        %2232 = vmatprep.subr.mxu0 0.0
        %2233 = vmatpush1.msra.mxu0 0.0
        %2234 = vmatprep.subr.mxu0 0.0
        %2235 = vmatpush1.msra.mxu0 0.0
        %2236 = vmatprep.subr.mxu0 0.0
        %2237 = vmatpush1.msra.mxu0 0.0
        %2238 = vmatprep.subr.mxu0 0.0
        %2239 = vmatpush1.msra.mxu0 0.0
        %2240 = vmatprep.subr.mxu0 0.0
        %2241 = vmatpush1.msra.mxu0 0.0
        %2242 = vmatprep.subr.mxu0 0.0
        %2243 = vmatpush1.msra.mxu0 0.0
        %2244 = vmatprep.subr.mxu0 0.0
        %2245 = vmatpush1.msra.mxu0 0.0
        %2246 = vmatprep.subr.mxu0 0.0
        %2247 = vmatpush1.msra.mxu0 0.0
        %2248 = vmatprep.subr.mxu0 0.0
        %2249 = vmatpush1.msra.mxu0 0.0
        %2250 = vmatprep.subr.mxu0 0.0
        %2251 = vmatpush1.msra.mxu0 0.0
        %2252 = vmatprep.subr.mxu0 0.0
        %2253 = vmatpush1.msra.mxu0 0.0
        %2254 = vmatprep.subr.mxu0 0.0
        %2255 = vmatpush1.msra.mxu0 0.0
        %2256 = vmatprep.subr.mxu0 0.0
        %2257 = vmatpush1.msra.mxu0 0.0
        %2258 = vmatprep.subr.mxu0 0.0
        %2259 = vmatpush1.msra.mxu0 0.0
        %2260 = vmatprep.subr.mxu0 0.0
        %2261 = vmatpush1.msra.mxu0 0.0
        %2262 = vmatprep.subr.mxu0 0.0
        %2263 = vmatpush1.msra.mxu0 0.0
        %2264 = vmatprep.subr.mxu0 0.0
        %2265 = vmatpush1.msra.mxu0 0.0
        %2266 = vmatprep.subr.mxu0 0.0
        %2267 = vmatpush1.msra.mxu0 0.0
        %2268 = vmatprep.subr.mxu0 0.0
        %2269 = vmatpush1.msra.mxu0 0.0
        %2270 = vmatprep.subr.mxu0 0.0
        %2271 = vmatpush1.msra.mxu0 0.0
        %2272 = vmatprep.subr.mxu0 0.0
        %2273 = vmatpush1.msra.mxu0 0.0
        %2274 = vmatprep.subr.mxu0 0.0
        %2275 = vmatpush1.msra.mxu0 0.0
        %2276 = vmatprep.mubr.f32.mxu0 0.0
        %2277 = vmatmul.mubr.f32.gmra.mrb[0].mxu0 %v238
        %v2278 = vpop.f32.mrb[0].mxu0
        %v2279 = vadd.f32 %v204, %v2278
        %v2280 = vpop.f32.mrb[0].mxu0
        %2281 = vdwg.mxu0
        %v2282 = vadd.f32 %v2279, 3.0
        %v2283 = vmax.f32 %v2282, 0.0
        %v2284 = vmin.f32 %v2283, 6.0
        %v2285 = vmul.f32 %v2284, 0.16666667
        %v2287 = vcombine.high %v2285, %v2285
        %v2289 = vunpack.c.l.s4 1966171168
        %v2290 = vunpack.c.0.s8 %v2289
        %v2291 = vlaneseq
        %v2292 = vshrl.u32 %v2291, 7
        %v2293 = vsub.s32 %v2290, %v2292
        %v2294 = vrot.slane %v2285, %v2293
        %v2296 = vunpack.c.l.s4 1966171168
        %v2297 = vunpack.c.0.s8 %v2296
        %v2298 = vlaneseq
        %v2299 = vshrl.u32 %v2298, 7
        %v2300 = vsub.s32 %v2297, %v2299
        %v2301 = vrot.slane %v2287, %v2300
        %v2302 = vcombine.high %v2294, %v2294
        %v2303 = vcombine.high %v2301, %v2301
        %v2305 = vunpack.c.l.s4 1966171168
        %v2306 = vunpack.c.0.s8 %v2305
        %v2307 = vlaneseq
        %v2308 = vshrl.u32 %v2307, 7
        %v2309 = vsub.s32 %v2306, %v2308
        %v2310 = vrot.slane %v2294, %v2309
        %v2312 = vunpack.c.l.s4 1966171168
        %v2313 = vunpack.c.0.s8 %v2312
        %v2314 = vlaneseq
        %v2315 = vshrl.u32 %v2314, 7
        %v2316 = vsub.s32 %v2313, %v2315
        %v2317 = vrot.slane %v2301, %v2316
        %v2319 = vunpack.c.l.s4 1966171168
        %v2320 = vunpack.c.0.s8 %v2319
        %v2321 = vlaneseq
        %v2322 = vshrl.u32 %v2321, 7
        %v2323 = vsub.s32 %v2320, %v2322
        %v2324 = vrot.slane %v2302, %v2323
        %v2326 = vunpack.c.l.s4 1966171168
        %v2327 = vunpack.c.0.s8 %v2326
        %v2328 = vlaneseq
        %v2329 = vshrl.u32 %v2328, 7
        %v2330 = vsub.s32 %v2327, %v2329
        %v2331 = vrot.slane %v2303, %v2330
        %v2332 = vcombine.high %v2310, %v2310
        %v2333 = vcombine.high %v2317, %v2317
        %v2334 = vcombine.high %v2324, %v2324
        %v2335 = vcombine.high %v2331, %v2331
        %v2336 = vlaneseq
        %v2337 = vshrl.u32 %v2336, 7
        %v2338 = vsub.s32 0, %v2337
        %v2339 = vrot.slane %v2310, %v2338
        %v2340 = vlaneseq
        %v2341 = vshrl.u32 %v2340, 7
        %v2342 = vsub.s32 0, %v2341
        %v2343 = vrot.slane %v2324, %v2342
        %v2344 = vlaneseq
        %v2345 = vshrl.u32 %v2344, 7
        %v2346 = vsub.s32 0, %v2345
        %v2347 = vrot.slane %v2332, %v2346
        %v2348 = vlaneseq
        %v2349 = vshrl.u32 %v2348, 7
        %v2350 = vsub.s32 0, %v2349
        %v2351 = vrot.slane %v2334, %v2350
        %v2352 = vlaneseq
        %v2353 = vshrl.u32 %v2352, 7
        %v2354 = vsub.s32 0, %v2353
        %v2355 = vrot.slane %v2317, %v2354
        %v2356 = vlaneseq
        %v2357 = vshrl.u32 %v2356, 7
        %v2358 = vsub.s32 0, %v2357
        %v2359 = vrot.slane %v2331, %v2358
        %v2360 = vlaneseq
        %v2361 = vshrl.u32 %v2360, 7
        %v2362 = vsub.s32 0, %v2361
        %v2363 = vrot.slane %v2333, %v2362
        %v2364 = vlaneseq
        %v2365 = vshrl.u32 %v2364, 7
        %v2366 = vsub.s32 0, %v2365
        %v2367 = vrot.slane %v2335, %v2366
        %2368 = vrot.lane.b32.xlu0 %v2339, 126
        %v2369 = vpop.permute.xlu0 %2368
        %2370 = vrot.lane.b32.xlu0 %v2343, 126
        %v2371 = vpop.permute.xlu0 %2370
        %2372 = vrot.lane.b32.xlu0 %v2347, 126
        %v2373 = vpop.permute.xlu0 %2372
        %2374 = vrot.lane.b32.xlu0 %v2351, 126
        %v2375 = vpop.permute.xlu0 %2374
        %2376 = vrot.lane.b32.xlu0 %v2355, 126
        %v2377 = vpop.permute.xlu0 %2376
        %2378 = vrot.lane.b32.xlu0 %v2359, 126
        %v2379 = vpop.permute.xlu0 %2378
        %2380 = vrot.lane.b32.xlu0 %v2363, 126
        %v2381 = vpop.permute.xlu0 %2380
        %2382 = vrot.lane.b32.xlu0 %v2367, 126
        %v2383 = vpop.permute.xlu0 %2382
        %2392 = vst.msk [vmem:[%s190 + $0x9] sm:$0x1] %vm420, %v2369
        %2393 = vst.msk [vmem:[%s190 + $0x19] sm:$0x1] %vm420, %v2371
        %2394 = vst.msk [vmem:[%s190 + $0x29] sm:$0x1] %vm420, %v2373
        %2395 = vst.msk [vmem:[%s190 + $0x39] sm:$0x1] %vm420, %v2375
        %2396 = vst.msk [vmem:[%s190 + $0x49] sm:$0x1] %vm420, %v2377
        %2397 = vst.msk [vmem:[%s190 + $0x59] sm:$0x1] %vm420, %v2379
        %2398 = vst.msk [vmem:[%s190 + $0x69] sm:$0x1] %vm420, %v2381
        %2399 = vst.msk [vmem:[%s190 + $0x79] sm:$0x1] %vm420, %v2383
        %v2400 = vld [vmem:[%s163 + $0xc] sm:$0x1]
        %v2401 = vld [vmem:[%s163 + $0x1c] sm:$0x1]
        %v2402 = vld [vmem:[%s163 + $0x2c] sm:$0x1]
        %v2403 = vld [vmem:[%s163 + $0x3c] sm:$0x1]
        %v2404 = vld [vmem:[%s163 + $0x4c] sm:$0x1]
        %v2405 = vld [vmem:[%s163 + $0x5c] sm:$0x1]
        %v2406 = vld [vmem:[%s163 + $0x6c] sm:$0x1]
        %v2407 = vld [vmem:[%s163 + $0x7c] sm:$0x1]
        %v2416 = vrot.slane %v2401, 7
        %v2417 = vsel %vm215, %v2416, %v2400
        %v2418 = vrot.slane %v2402, 6
        %v2419 = vsel %vm218, %v2418, %v2417
        %v2420 = vrot.slane %v2403, 5
        %v2421 = vsel %vm221, %v2420, %v2419
        %v2422 = vrot.slane %v2404, 4
        %v2423 = vsel %vm224, %v2422, %v2421
        %v2424 = vrot.slane %v2405, 3
        %v2425 = vsel %vm227, %v2424, %v2423
        %v2426 = vrot.slane %v2406, 2
        %v2427 = vsel %vm230, %v2426, %v2425
        %v2428 = vrot.slane %v2407, 1
        %v2429 = vsel %vm233, %v2428, %v2427
        %2431 = vmatprep.subr.mxu0 0.0
        %2432 = vmatpush1.msra.mxu0 %v2429
        %2433 = vmatprep.subr.mxu0 0.0
        %2434 = vmatpush1.msra.mxu0 0.0
        %2435 = vmatprep.subr.mxu0 0.0
        %2436 = vmatpush1.msra.mxu0 0.0
        %2437 = vmatprep.subr.mxu0 0.0
        %2438 = vmatpush1.msra.mxu0 0.0
        %2439 = vmatprep.subr.mxu0 0.0
        %2440 = vmatpush1.msra.mxu0 0.0
        %2441 = vmatprep.subr.mxu0 0.0
        %2442 = vmatpush1.msra.mxu0 0.0
        %2443 = vmatprep.subr.mxu0 0.0
        %2444 = vmatpush1.msra.mxu0 0.0
        %2445 = vmatprep.subr.mxu0 0.0
        %2446 = vmatpush1.msra.mxu0 0.0
        %2447 = vmatprep.subr.mxu0 0.0
        %2448 = vmatpush1.msra.mxu0 0.0
        %2449 = vmatprep.subr.mxu0 0.0
        %2450 = vmatpush1.msra.mxu0 0.0
        %2451 = vmatprep.subr.mxu0 0.0
        %2452 = vmatpush1.msra.mxu0 0.0
        %2453 = vmatprep.subr.mxu0 0.0
        %2454 = vmatpush1.msra.mxu0 0.0
        %2455 = vmatprep.subr.mxu0 0.0
        %2456 = vmatpush1.msra.mxu0 0.0
        %2457 = vmatprep.subr.mxu0 0.0
        %2458 = vmatpush1.msra.mxu0 0.0
        %2459 = vmatprep.subr.mxu0 0.0
        %2460 = vmatpush1.msra.mxu0 0.0
        %2461 = vmatprep.subr.mxu0 0.0
        %2462 = vmatpush1.msra.mxu0 0.0
        %2463 = vmatprep.subr.mxu0 0.0
        %2464 = vmatpush1.msra.mxu0 0.0
        %2465 = vmatprep.subr.mxu0 0.0
        %2466 = vmatpush1.msra.mxu0 0.0
        %2467 = vmatprep.subr.mxu0 0.0
        %2468 = vmatpush1.msra.mxu0 0.0
        %2469 = vmatprep.subr.mxu0 0.0
        %2470 = vmatpush1.msra.mxu0 0.0
        %2471 = vmatprep.subr.mxu0 0.0
        %2472 = vmatpush1.msra.mxu0 0.0
        %2473 = vmatprep.subr.mxu0 0.0
        %2474 = vmatpush1.msra.mxu0 0.0
        %2475 = vmatprep.subr.mxu0 0.0
        %2476 = vmatpush1.msra.mxu0 0.0
        %2477 = vmatprep.subr.mxu0 0.0
        %2478 = vmatpush1.msra.mxu0 0.0
        %2479 = vmatprep.subr.mxu0 0.0
        %2480 = vmatpush1.msra.mxu0 0.0
        %2481 = vmatprep.subr.mxu0 0.0
        %2482 = vmatpush1.msra.mxu0 0.0
        %2483 = vmatprep.subr.mxu0 0.0
        %2484 = vmatpush1.msra.mxu0 0.0
        %2485 = vmatprep.subr.mxu0 0.0
        %2486 = vmatpush1.msra.mxu0 0.0
        %2487 = vmatprep.subr.mxu0 0.0
        %2488 = vmatpush1.msra.mxu0 0.0
        %2489 = vmatprep.subr.mxu0 0.0
        %2490 = vmatpush1.msra.mxu0 0.0
        %2491 = vmatprep.subr.mxu0 0.0
        %2492 = vmatpush1.msra.mxu0 0.0
        %2493 = vmatprep.subr.mxu0 0.0
        %2494 = vmatpush1.msra.mxu0 0.0
        %2495 = vmatprep.mubr.f32.mxu0 0.0
        %2496 = vmatmul.mubr.f32.gmra.mrb[0].mxu0 %v238
        %v2497 = vpop.f32.mrb[0].mxu0
        %v2498 = vadd.f32 %v204, %v2497
        %v2499 = vpop.f32.mrb[0].mxu0
        %2500 = vdwg.mxu0
        %v2501 = vadd.f32 %v2498, 3.0
        %v2502 = vmax.f32 %v2501, 0.0
        %v2503 = vmin.f32 %v2502, 6.0
        %v2504 = vmul.f32 %v2503, 0.16666667
        %v2506 = vcombine.high %v2504, %v2504
        %v2508 = vunpack.c.l.s4 1966171168
        %v2509 = vunpack.c.0.s8 %v2508
        %v2510 = vlaneseq
        %v2511 = vshrl.u32 %v2510, 7
        %v2512 = vsub.s32 %v2509, %v2511
        %v2513 = vrot.slane %v2504, %v2512
        %v2515 = vunpack.c.l.s4 1966171168
        %v2516 = vunpack.c.0.s8 %v2515
        %v2517 = vlaneseq
        %v2518 = vshrl.u32 %v2517, 7
        %v2519 = vsub.s32 %v2516, %v2518
        %v2520 = vrot.slane %v2506, %v2519
        %v2521 = vcombine.high %v2513, %v2513
        %v2522 = vcombine.high %v2520, %v2520
        %v2524 = vunpack.c.l.s4 1966171168
        %v2525 = vunpack.c.0.s8 %v2524
        %v2526 = vlaneseq
        %v2527 = vshrl.u32 %v2526, 7
        %v2528 = vsub.s32 %v2525, %v2527
        %v2529 = vrot.slane %v2513, %v2528
        %v2531 = vunpack.c.l.s4 1966171168
        %v2532 = vunpack.c.0.s8 %v2531
        %v2533 = vlaneseq
        %v2534 = vshrl.u32 %v2533, 7
        %v2535 = vsub.s32 %v2532, %v2534
        %v2536 = vrot.slane %v2520, %v2535
        %v2538 = vunpack.c.l.s4 1966171168
        %v2539 = vunpack.c.0.s8 %v2538
        %v2540 = vlaneseq
        %v2541 = vshrl.u32 %v2540, 7
        %v2542 = vsub.s32 %v2539, %v2541
        %v2543 = vrot.slane %v2521, %v2542
        %v2545 = vunpack.c.l.s4 1966171168
        %v2546 = vunpack.c.0.s8 %v2545
        %v2547 = vlaneseq
        %v2548 = vshrl.u32 %v2547, 7
        %v2549 = vsub.s32 %v2546, %v2548
        %v2550 = vrot.slane %v2522, %v2549
        %v2551 = vcombine.high %v2529, %v2529
        %v2552 = vcombine.high %v2536, %v2536
        %v2553 = vcombine.high %v2543, %v2543
        %v2554 = vcombine.high %v2550, %v2550
        %v2555 = vlaneseq
        %v2556 = vshrl.u32 %v2555, 7
        %v2557 = vsub.s32 0, %v2556
        %v2558 = vrot.slane %v2529, %v2557
        %v2559 = vlaneseq
        %v2560 = vshrl.u32 %v2559, 7
        %v2561 = vsub.s32 0, %v2560
        %v2562 = vrot.slane %v2543, %v2561
        %v2563 = vlaneseq
        %v2564 = vshrl.u32 %v2563, 7
        %v2565 = vsub.s32 0, %v2564
        %v2566 = vrot.slane %v2551, %v2565
        %v2567 = vlaneseq
        %v2568 = vshrl.u32 %v2567, 7
        %v2569 = vsub.s32 0, %v2568
        %v2570 = vrot.slane %v2553, %v2569
        %v2571 = vlaneseq
        %v2572 = vshrl.u32 %v2571, 7
        %v2573 = vsub.s32 0, %v2572
        %v2574 = vrot.slane %v2536, %v2573
        %v2575 = vlaneseq
        %v2576 = vshrl.u32 %v2575, 7
        %v2577 = vsub.s32 0, %v2576
        %v2578 = vrot.slane %v2550, %v2577
        %v2579 = vlaneseq
        %v2580 = vshrl.u32 %v2579, 7
        %v2581 = vsub.s32 0, %v2580
        %v2582 = vrot.slane %v2552, %v2581
        %v2583 = vlaneseq
        %v2584 = vshrl.u32 %v2583, 7
        %v2585 = vsub.s32 0, %v2584
        %v2586 = vrot.slane %v2554, %v2585
        %2587 = vrot.lane.b32.xlu0 %v2558, 126
        %v2588 = vpop.permute.xlu0 %2587
        %2589 = vrot.lane.b32.xlu0 %v2562, 126
        %v2590 = vpop.permute.xlu0 %2589
        %2591 = vrot.lane.b32.xlu0 %v2566, 126
        %v2592 = vpop.permute.xlu0 %2591
        %2593 = vrot.lane.b32.xlu0 %v2570, 126
        %v2594 = vpop.permute.xlu0 %2593
        %2595 = vrot.lane.b32.xlu0 %v2574, 126
        %v2596 = vpop.permute.xlu0 %2595
        %2597 = vrot.lane.b32.xlu0 %v2578, 126
        %v2598 = vpop.permute.xlu0 %2597
        %2599 = vrot.lane.b32.xlu0 %v2582, 126
        %v2600 = vpop.permute.xlu0 %2599
        %2601 = vrot.lane.b32.xlu0 %v2586, 126
        %v2602 = vpop.permute.xlu0 %2601
        %2611 = vst.msk [vmem:[%s190 + $0xa] sm:$0x1] %vm420, %v2588
        %2612 = vst.msk [vmem:[%s190 + $0x1a] sm:$0x1] %vm420, %v2590
        %2613 = vst.msk [vmem:[%s190 + $0x2a] sm:$0x1] %vm420, %v2592
        %2614 = vst.msk [vmem:[%s190 + $0x3a] sm:$0x1] %vm420, %v2594
        %2615 = vst.msk [vmem:[%s190 + $0x4a] sm:$0x1] %vm420, %v2596
        %2616 = vst.msk [vmem:[%s190 + $0x5a] sm:$0x1] %vm420, %v2598
        %2617 = vst.msk [vmem:[%s190 + $0x6a] sm:$0x1] %vm420, %v2600
        %2618 = vst.msk [vmem:[%s190 + $0x7a] sm:$0x1] %vm420, %v2602
        %v2619 = vld [vmem:[%s163 + $0xd] sm:$0x1]
        %v2620 = vld [vmem:[%s163 + $0x1d] sm:$0x1]
        %v2621 = vld [vmem:[%s163 + $0x2d] sm:$0x1]
        %v2622 = vld [vmem:[%s163 + $0x3d] sm:$0x1]
        %v2623 = vld [vmem:[%s163 + $0x4d] sm:$0x1]
        %v2624 = vld [vmem:[%s163 + $0x5d] sm:$0x1]
        %v2625 = vld [vmem:[%s163 + $0x6d] sm:$0x1]
        %v2626 = vld [vmem:[%s163 + $0x7d] sm:$0x1]
        %v2635 = vrot.slane %v2620, 7
        %v2636 = vsel %vm215, %v2635, %v2619
        %v2637 = vrot.slane %v2621, 6
        %v2638 = vsel %vm218, %v2637, %v2636
        %v2639 = vrot.slane %v2622, 5
        %v2640 = vsel %vm221, %v2639, %v2638
        %v2641 = vrot.slane %v2623, 4
        %v2642 = vsel %vm224, %v2641, %v2640
        %v2643 = vrot.slane %v2624, 3
        %v2644 = vsel %vm227, %v2643, %v2642
        %v2645 = vrot.slane %v2625, 2
        %v2646 = vsel %vm230, %v2645, %v2644
        %v2647 = vrot.slane %v2626, 1
        %v2648 = vsel %vm233, %v2647, %v2646
        %2650 = vmatprep.subr.mxu0 0.0
        %2651 = vmatpush1.msra.mxu0 %v2648
        %2652 = vmatprep.subr.mxu0 0.0
        %2653 = vmatpush1.msra.mxu0 0.0
        %2654 = vmatprep.subr.mxu0 0.0
        %2655 = vmatpush1.msra.mxu0 0.0
        %2656 = vmatprep.subr.mxu0 0.0
        %2657 = vmatpush1.msra.mxu0 0.0
        %2658 = vmatprep.subr.mxu0 0.0
        %2659 = vmatpush1.msra.mxu0 0.0
        %2660 = vmatprep.subr.mxu0 0.0
        %2661 = vmatpush1.msra.mxu0 0.0
        %2662 = vmatprep.subr.mxu0 0.0
        %2663 = vmatpush1.msra.mxu0 0.0
        %2664 = vmatprep.subr.mxu0 0.0
        %2665 = vmatpush1.msra.mxu0 0.0
        %2666 = vmatprep.subr.mxu0 0.0
        %2667 = vmatpush1.msra.mxu0 0.0
        %2668 = vmatprep.subr.mxu0 0.0
        %2669 = vmatpush1.msra.mxu0 0.0
        %2670 = vmatprep.subr.mxu0 0.0
        %2671 = vmatpush1.msra.mxu0 0.0
        %2672 = vmatprep.subr.mxu0 0.0
        %2673 = vmatpush1.msra.mxu0 0.0
        %2674 = vmatprep.subr.mxu0 0.0
        %2675 = vmatpush1.msra.mxu0 0.0
        %2676 = vmatprep.subr.mxu0 0.0
        %2677 = vmatpush1.msra.mxu0 0.0
        %2678 = vmatprep.subr.mxu0 0.0
        %2679 = vmatpush1.msra.mxu0 0.0
        %2680 = vmatprep.subr.mxu0 0.0
        %2681 = vmatpush1.msra.mxu0 0.0
        %2682 = vmatprep.subr.mxu0 0.0
        %2683 = vmatpush1.msra.mxu0 0.0
        %2684 = vmatprep.subr.mxu0 0.0
        %2685 = vmatpush1.msra.mxu0 0.0
        %2686 = vmatprep.subr.mxu0 0.0
        %2687 = vmatpush1.msra.mxu0 0.0
        %2688 = vmatprep.subr.mxu0 0.0
        %2689 = vmatpush1.msra.mxu0 0.0
        %2690 = vmatprep.subr.mxu0 0.0
        %2691 = vmatpush1.msra.mxu0 0.0
        %2692 = vmatprep.subr.mxu0 0.0
        %2693 = vmatpush1.msra.mxu0 0.0
        %2694 = vmatprep.subr.mxu0 0.0
        %2695 = vmatpush1.msra.mxu0 0.0
        %2696 = vmatprep.subr.mxu0 0.0
        %2697 = vmatpush1.msra.mxu0 0.0
        %2698 = vmatprep.subr.mxu0 0.0
        %2699 = vmatpush1.msra.mxu0 0.0
        %2700 = vmatprep.subr.mxu0 0.0
        %2701 = vmatpush1.msra.mxu0 0.0
        %2702 = vmatprep.subr.mxu0 0.0
        %2703 = vmatpush1.msra.mxu0 0.0
        %2704 = vmatprep.subr.mxu0 0.0
        %2705 = vmatpush1.msra.mxu0 0.0
        %2706 = vmatprep.subr.mxu0 0.0
        %2707 = vmatpush1.msra.mxu0 0.0
        %2708 = vmatprep.subr.mxu0 0.0
        %2709 = vmatpush1.msra.mxu0 0.0
        %2710 = vmatprep.subr.mxu0 0.0
        %2711 = vmatpush1.msra.mxu0 0.0
        %2712 = vmatprep.subr.mxu0 0.0
        %2713 = vmatpush1.msra.mxu0 0.0
        %2714 = vmatprep.mubr.f32.mxu0 0.0
        %2715 = vmatmul.mubr.f32.gmra.mrb[0].mxu0 %v238
        %v2716 = vpop.f32.mrb[0].mxu0
        %v2717 = vadd.f32 %v204, %v2716
        %v2718 = vpop.f32.mrb[0].mxu0
        %2719 = vdwg.mxu0
        %v2720 = vadd.f32 %v2717, 3.0
        %v2721 = vmax.f32 %v2720, 0.0
        %v2722 = vmin.f32 %v2721, 6.0
        %v2723 = vmul.f32 %v2722, 0.16666667
        %v2725 = vcombine.high %v2723, %v2723
        %v2727 = vunpack.c.l.s4 1966171168
        %v2728 = vunpack.c.0.s8 %v2727
        %v2729 = vlaneseq
        %v2730 = vshrl.u32 %v2729, 7
        %v2731 = vsub.s32 %v2728, %v2730
        %v2732 = vrot.slane %v2723, %v2731
        %v2734 = vunpack.c.l.s4 1966171168
        %v2735 = vunpack.c.0.s8 %v2734
        %v2736 = vlaneseq
        %v2737 = vshrl.u32 %v2736, 7
        %v2738 = vsub.s32 %v2735, %v2737
        %v2739 = vrot.slane %v2725, %v2738
        %v2740 = vcombine.high %v2732, %v2732
        %v2741 = vcombine.high %v2739, %v2739
        %v2743 = vunpack.c.l.s4 1966171168
        %v2744 = vunpack.c.0.s8 %v2743
        %v2745 = vlaneseq
        %v2746 = vshrl.u32 %v2745, 7
        %v2747 = vsub.s32 %v2744, %v2746
        %v2748 = vrot.slane %v2732, %v2747
        %v2750 = vunpack.c.l.s4 1966171168
        %v2751 = vunpack.c.0.s8 %v2750
        %v2752 = vlaneseq
        %v2753 = vshrl.u32 %v2752, 7
        %v2754 = vsub.s32 %v2751, %v2753
        %v2755 = vrot.slane %v2739, %v2754
        %v2757 = vunpack.c.l.s4 1966171168
        %v2758 = vunpack.c.0.s8 %v2757
        %v2759 = vlaneseq
        %v2760 = vshrl.u32 %v2759, 7
        %v2761 = vsub.s32 %v2758, %v2760
        %v2762 = vrot.slane %v2740, %v2761
        %v2764 = vunpack.c.l.s4 1966171168
        %v2765 = vunpack.c.0.s8 %v2764
        %v2766 = vlaneseq
        %v2767 = vshrl.u32 %v2766, 7
        %v2768 = vsub.s32 %v2765, %v2767
        %v2769 = vrot.slane %v2741, %v2768
        %v2770 = vcombine.high %v2748, %v2748
        %v2771 = vcombine.high %v2755, %v2755
        %v2772 = vcombine.high %v2762, %v2762
        %v2773 = vcombine.high %v2769, %v2769
        %v2774 = vlaneseq
        %v2775 = vshrl.u32 %v2774, 7
        %v2776 = vsub.s32 0, %v2775
        %v2777 = vrot.slane %v2748, %v2776
        %v2778 = vlaneseq
        %v2779 = vshrl.u32 %v2778, 7
        %v2780 = vsub.s32 0, %v2779
        %v2781 = vrot.slane %v2762, %v2780
        %v2782 = vlaneseq
        %v2783 = vshrl.u32 %v2782, 7
        %v2784 = vsub.s32 0, %v2783
        %v2785 = vrot.slane %v2770, %v2784
        %v2786 = vlaneseq
        %v2787 = vshrl.u32 %v2786, 7
        %v2788 = vsub.s32 0, %v2787
        %v2789 = vrot.slane %v2772, %v2788
        %v2790 = vlaneseq
        %v2791 = vshrl.u32 %v2790, 7
        %v2792 = vsub.s32 0, %v2791
        %v2793 = vrot.slane %v2755, %v2792
        %v2794 = vlaneseq
        %v2795 = vshrl.u32 %v2794, 7
        %v2796 = vsub.s32 0, %v2795
        %v2797 = vrot.slane %v2769, %v2796
        %v2798 = vlaneseq
        %v2799 = vshrl.u32 %v2798, 7
        %v2800 = vsub.s32 0, %v2799
        %v2801 = vrot.slane %v2771, %v2800
        %v2802 = vlaneseq
        %v2803 = vshrl.u32 %v2802, 7
        %v2804 = vsub.s32 0, %v2803
        %v2805 = vrot.slane %v2773, %v2804
        %2806 = vrot.lane.b32.xlu0 %v2777, 126
        %v2807 = vpop.permute.xlu0 %2806
        %2808 = vrot.lane.b32.xlu0 %v2781, 126
        %v2809 = vpop.permute.xlu0 %2808
        %2810 = vrot.lane.b32.xlu0 %v2785, 126
        %v2811 = vpop.permute.xlu0 %2810
        %2812 = vrot.lane.b32.xlu0 %v2789, 126
        %v2813 = vpop.permute.xlu0 %2812
        %2814 = vrot.lane.b32.xlu0 %v2793, 126
        %v2815 = vpop.permute.xlu0 %2814
        %2816 = vrot.lane.b32.xlu0 %v2797, 126
        %v2817 = vpop.permute.xlu0 %2816
        %2818 = vrot.lane.b32.xlu0 %v2801, 126
        %v2819 = vpop.permute.xlu0 %2818
        %2820 = vrot.lane.b32.xlu0 %v2805, 126
        %v2821 = vpop.permute.xlu0 %2820
        %2830 = vst.msk [vmem:[%s190 + $0xb] sm:$0x1] %vm420, %v2807
        %2831 = vst.msk [vmem:[%s190 + $0x1b] sm:$0x1] %vm420, %v2809
        %2832 = vst.msk [vmem:[%s190 + $0x2b] sm:$0x1] %vm420, %v2811
        %2833 = vst.msk [vmem:[%s190 + $0x3b] sm:$0x1] %vm420, %v2813
        %2834 = vst.msk [vmem:[%s190 + $0x4b] sm:$0x1] %vm420, %v2815
        %2835 = vst.msk [vmem:[%s190 + $0x5b] sm:$0x1] %vm420, %v2817
        %2836 = vst.msk [vmem:[%s190 + $0x6b] sm:$0x1] %vm420, %v2819
        %2837 = vst.msk [vmem:[%s190 + $0x7b] sm:$0x1] %vm420, %v2821
        %p2838 = scmp.lt.s32.totalorder %s17, 1
        %s2839 = scalar_select %p2838, %s17, 1
        %s2840 = smul.addr %s2839, 16
        %s2841 = smul.addr %s2840, 8
        %s2842 = scalar_lea.vmem %s3, %s2841
        // Predicated region
        $region37: #{tpu_custom_call.1} parent=31 // pred_check
          %p2843 = pneg %p103
        $region38: #{tpu_custom_call.1} parent=31 // pred_check_branch
          %2845 = sbr.rel (%p2843) target = $region40
        $region39: #{tpu_custom_call.1} parent=31 // pred_region
          _
        $region40: #{tpu_custom_call.1} parent=31 // pred_fallthru
          _
      $region32: #{tpu_custom_call.1} parent=5 // pred_fallthru
        _
      %p2846 = scmp.le.s32.totalorder 2, %s12
      // Predicated region
      $region41: #{tpu_custom_call.1} parent=5 // pred_check
        %p2847 = pneg %p2846
      $region42: #{tpu_custom_call.1} parent=5 // pred_check_branch
        %2849 = sbr.rel (%p2847) target = $region44
      $region43: #{tpu_custom_call.1} parent=5 // pred_region
        %s2850 = ssub.s32 %s12, 2
        // Predicated region
        $region45: #{tpu_custom_call.1} parent=43 // pred_check
          %p2851 = pneg %p109
        $region46: #{tpu_custom_call.1} parent=43 // pred_check_branch
          %2853 = sbr.rel (%p2851) target = $region48
        $region47: #{tpu_custom_call.1} parent=43 // pred_region
          %p2854 = scmp.lt.s32.totalorder %s18, 1
          %s2855 = scalar_select %p2854, %s18, 1
          %s2856 = smul.addr %s2855, 16
          %s2857 = smul.addr %s2856, 8
          %s2858 = scalar_lea.vmem %s3, %s2857
        $region48: #{tpu_custom_call.1} parent=43 // pred_fallthru
          _
      $region44: #{tpu_custom_call.1} parent=5 // pred_fallthru
        _
    $region6: #{tpu_custom_call.1} parent=1 // loop_footer
      %s16 = sadd.s32 1, %s12
    $region7: #{tpu_custom_call.1} parent=1 // loop_footer_branch
      %11 = sbr.rel target = $region3
    $region8: #{tpu_custom_call.1} parent=1 // loop_exit
      _
    %2859 = vsyncpa [#allocation3], 1
    %s2860 = scalar_lea.sflag [#allocation3], 1
    %2861 = vsyncpa %s2860, 1

</llo_original>
